<compile_context>
chip_gen: v7x
topology: tpu7x:2x2x1
jax: 0.10.0
libtpu: 0.0.40
codegen_flags: <defaults>
</compile_context>

<pallas_src>
import jax
import jax.numpy as jnp
from jax.experimental import pallas as pl
from jax.experimental.pallas import tpu as pltpu


# -----------------------------------------------------------------------------
# Pallas kernel: all graphs packed into one step, all GGNN layers fused.
# -----------------------------------------------------------------------------
def _ggnn_kernel(x_ref, at_ref, wt_ref, wb_ref, bg_ref, out_ref):
    # x_ref:   (M, H)      packed node features (M = G*N), f32
    # at_ref:  (M, M)      block-diagonal transposed 0/1 edge mask, bf16
    # wt_ref:  (L, H, 4H)  per-layer fused top gate weight [W[l]Wir^T|W[l]Wiz^T|W[l]Win^T|0], bf16
    # wb_ref:  (H, 4H)     layer-invariant bottom gate weight [Whr^T|Whz^T|0|Whn^T], bf16
    # bg_ref:  (1, 4H)     fused GRU gate bias, f32
    # out_ref: (M, H)
    L = wt_ref.shape[0]
    H = x_ref.shape[-1]

    h = x_ref[...]                                     # f32 recurrent state (M, H)

    # loop-invariant loads hoisted out of the (static) layer loop
    a_t = at_ref[...]                                  # (M, M) bf16
    w_bot = wb_ref[...]                                # (H, 4H) bf16
    bias = bg_ref[...]                                 # (1, 4H) f32 (broadcasts in add)

    for l in range(L):  # static unroll; L is a compile-time constant
        hb = h.astype(jnp.bfloat16)

        # aggregated neighbor state: s[i] = sum_{j: adj[j,i]!=0} h[j]   (MXU, bf16->f32)
        s = jnp.dot(a_t, hb, preferred_element_type=jnp.float32)                 # (M, H)

        # fused GRU gate pre-activations.  Two dots summed: the hb-dependent dot has
        # no dependence on s, so it can overlap the aggregation matmul on the MXU.
        g = (jnp.dot(hb, w_bot, preferred_element_type=jnp.float32)
             + jnp.dot(s.astype(jnp.bfloat16), wt_ref[l],
                       preferred_element_type=jnp.float32)
             + bias)                                                              # (M, 4H)

        # GRUCell elementwise math in f32 (PyTorch gate order r, z, n).
        # One sigmoid pass for both r and z.
        rz = jax.nn.sigmoid(g[:, :2 * H])
        r = rz[:, :H]
        z = rz[:, H:]
        n = jnp.tanh(g[:, 2 * H:3 * H] + r * g[:, 3 * H:4 * H])
        h = (1.0 - z) * n + z * h

    # single final store (H=32 -> masked vst; only one store total, low priority)
    out_ref[...] = h.astype(out_ref.dtype)


# -----------------------------------------------------------------------------
# Fused-weight construction shared by wrapper and the structural reference.
# -----------------------------------------------------------------------------
def _build_fused_gate_weights(weight, weight_ih, weight_hh, bias_ih, bias_hh):
    L, H, _ = weight.shape
    wih_t = weight_ih.T.astype(jnp.float32)                               # (H, 3H)
    whh_t = weight_hh.T.astype(jnp.float32)                               # (H, 3H)

    # Fold the per-layer message weight into the GRU input-hidden weight (f32, once):
    #   agg @ Wih^T == (A^T h W[l]) @ Wih^T == (A^T h) @ (W[l] @ Wih^T)
    fused_ih = jnp.einsum("lhk,kg->lhg", weight.astype(jnp.float32), wih_t)  # (L, H, 3H)

    # top weight (applied to s = A^T h): columns [r_ih | z_ih | gi_n | 0]
    w_top = jnp.concatenate(
        [fused_ih, jnp.zeros((L, H, H), jnp.float32)], axis=-1
    ).astype(jnp.bfloat16)                                                # (L, H, 4H)

    # bottom weight (applied to h): columns [r_hh | z_hh | 0 | gh_n]
    w_bot = jnp.concatenate(
        [whh_t[:, :2 * H], jnp.zeros((H, H), jnp.float32), whh_t[:, 2 * H:]], axis=1
    ).astype(jnp.bfloat16)                                                # (H, 4H)

    # bias columns: [b_ir+b_hr | b_iz+b_hz | b_in | b_hn]
    b_gate = jnp.concatenate(
        [bias_ih[:2 * H] + bias_hh[:2 * H], bias_ih[2 * H:], bias_hh[2 * H:]]
    ).astype(jnp.float32)[None, :]                                        # (1, 4H)

    return w_top, w_bot, b_gate


# -----------------------------------------------------------------------------
# Wrapper: batch packing, mask transpose/block-diag, weight folding, pallas_call
# -----------------------------------------------------------------------------
@jax.jit
def dense_ggnn_forward(x, adj, weight, weight_ih, weight_hh, bias_ih, bias_hh):
    B, N, D = x.shape
    L, H, _ = weight.shape
    assert D <= H, "GatedGraphConv requires in_channels <= out_channels"

    # GatedGraphConv zero-pads the input feature dim up to out_channels.
    if D < H:
        x = jnp.pad(x, ((0, 0), (0, 0), (0, H - D)))
    x = x.astype(jnp.float32)

    # ---- batch packing.
    # num_steps=1 packs all B graphs into one grid step (M = B*N = 128): best for
    # single-TensorCore v5e/v6e (one pipeline prologue, full MXU rows).
    # TODO(synk): on v7x (2 TCs) benchmark num_steps=2 with ("parallel",) vs this
    # single-step layout; at ~us total work the split may not amortize.
    num_steps = 1
    G = B // num_steps
    M = G * N
    x_packed = x.reshape(num_steps, M, H)

    # ---- transposed 0/1 edge mask, layer-invariant, block-diagonalized per step.
    # agg[i] = sum_{j: adj[j,i]!=0} h[j]  (edge weights dropped, as in the module).
    amask_t = (adj != 0).astype(jnp.bfloat16).transpose(0, 2, 1)          # (B, N, N)
    eye_g = jnp.eye(G, dtype=jnp.bfloat16)
    amask_t_blk = jnp.einsum(
        "sgij,gh->sgihj", amask_t.reshape(num_steps, G, N, N), eye_g
    ).reshape(num_steps, M, M)                                            # (S, M, M)

    # ---- fused gate weights (message weight folded into the ih columns).
    w_top, w_bot, b_gate = _build_fused_gate_weights(
        weight, weight_ih, weight_hh, bias_ih, bias_hh)

    # NOTE(scaling): the (M, M) block-diag mask grows as (G*N)^2 and is double-buffered
    # by the BlockSpec pipeline; (G-1)/G of its MACs are zeros.  Once M exceeds ~256,
    # switch to a per-graph grid axis (mask stays (N,N)) and re-derive the VMEM budget
    # (v7x has only 64 MiB physical).  At current sizes (~32 KB/step) no action needed.
    out = pl.pallas_call(
        _ggnn_kernel,
        out_shape=jax.ShapeDtypeStruct((num_steps, M, H), jnp.float32),
        grid=(num_steps,),
        in_specs=[
            pl.BlockSpec((None, M, H), lambda s: (s, 0, 0)),      # packed node feats
            pl.BlockSpec((None, M, M), lambda s: (s, 0, 0)),      # block-diag A^T mask
            pl.BlockSpec((L, H, 4 * H), lambda s: (0, 0, 0)),     # fused top gate weight
            pl.BlockSpec((H, 4 * H), lambda s: (0, 0)),           # bottom gate weight
            pl.BlockSpec((1, 4 * H), lambda s: (0, 0)),           # fused gate bias
        ],
        out_specs=pl.BlockSpec((None, M, H), lambda s: (s, 0, 0)),
        compiler_params=pltpu.CompilerParams(dimension_semantics=("parallel",)),
    )(x_packed, amask_t_blk, w_top, w_bot, b_gate)

    return out.reshape(B, N, H)


# -----------------------------------------------------------------------------
# Pure-JAX references.
#   dense_ggnn_reference       : exact f32 GatedGraphConv + GRUCell semantics.
#   dense_ggnn_reference_fused : mirrors the kernel's fused/bf16 formulation exactly
#                                (validates packing / folding / gate indexing).
# -----------------------------------------------------------------------------
def dense_ggnn_reference(x, adj, weight, weight_ih, weight_hh, bias_ih, bias_hh):
    B, N, D = x.shape
    L, H, _ = weight.shape
    if D < H:
        x = jnp.pad(x, ((0, 0), (0, 0), (0, H - D)))
    h = x.astype(jnp.float32)
    amask = (adj != 0).astype(jnp.float32)                       # (B, N, N)
    for l in range(L):
        m = jnp.einsum("bnd,dh->bnh", h, weight[l].astype(jnp.float32))
        agg = jnp.einsum("bji,bjh->bih", amask, m)
        gi = jnp.einsum("bnh,gh->bng", agg, weight_ih.astype(jnp.float32)) + bias_ih
        gh = jnp.einsum("bnh,gh->bng", h, weight_hh.astype(jnp.float32)) + bias_hh
        r = jax.nn.sigmoid(gi[..., 0:H] + gh[..., 0:H])
        z = jax.nn.sigmoid(gi[..., H:2 * H] + gh[..., H:2 * H])
        n = jnp.tanh(gi[..., 2 * H:] + r * gh[..., 2 * H:])
        h = (1.0 - z) * n + z * h
    return h


def dense_ggnn_reference_fused(x, adj, weight, weight_ih, weight_hh, bias_ih, bias_hh):
    B, N, D = x.shape
    L, H, _ = weight.shape
    if D < H:
        x = jnp.pad(x, ((0, 0), (0, 0), (0, H - D)))
    h = x.astype(jnp.float32)
    amask_t = (adj != 0).astype(jnp.bfloat16).transpose(0, 2, 1)          # (B, N, N)
    w_top, w_bot, b_gate = _build_fused_gate_weights(
        weight, weight_ih, weight_hh, bias_ih, bias_hh)
    f32 = jnp.float32
    for l in range(L):
        hb = h.astype(jnp.bfloat16)
        s = jnp.einsum("bij,bjh->bih", amask_t, hb, preferred_element_type=f32)
        g = (jnp.einsum("bnh,hg->bng", hb, w_bot, preferred_element_type=f32)
             + jnp.einsum("bnh,hg->bng", s.astype(jnp.bfloat16), w_top[l],
                          preferred_element_type=f32)
             + b_gate)
        rz = jax.nn.sigmoid(g[..., :2 * H])
        r = rz[..., :H]
        z = rz[..., H:]
        n = jnp.tanh(g[..., 2 * H:3 * H] + r * g[..., 3 * H:4 * H])
        h = (1.0 - z) * n + z * h
    return h


if __name__ == "__main__":
    # Small, module-consistent shapes: B=8 graphs (packed into one M=128 grid step),
    # N=16 nodes, D=24 input feats, out_channels H=32, num_layers=2.
    B, N, D = 8, 16, 24
    H, L = 32, 2

    key = jax.random.PRNGKey(0)
    k_x, k_adj, k_w, k_wih, k_whh, k_bih, k_bhh = jax.random.split(key, 7)

    x = jax.random.normal(k_x, (B, N, D), dtype=jnp.float32)
    adj = (jax.random.uniform(k_adj, (B, N, N)) < 0.3).astype(jnp.float32)

    scale = 1.0 / jnp.sqrt(H)
    weight = jax.random.uniform(k_w, (L, H, H), minval=-scale, maxval=scale)
    weight_ih = jax.random.uniform(k_wih, (3 * H, H), minval=-scale, maxval=scale)
    weight_hh = jax.random.uniform(k_whh, (3 * H, H), minval=-scale, maxval=scale)
    bias_ih = jax.random.uniform(k_bih, (3 * H,), minval=-scale, maxval=scale)
    bias_hh = jax.random.uniform(k_bhh, (3 * H,), minval=-scale, maxval=scale)

    out = dense_ggnn_forward(x, adj, weight, weight_ih, weight_hh, bias_ih, bias_hh)
    out = jax.block_until_ready(out)
    assert out.shape == (B, N, H), out.shape

    # Tight structural check vs. a reference that mirrors the kernel's fused bf16
    # formulation exactly (validates packing / block-diag aggregation / W[l] folding
    # / split-dot gate indexing).
    ref_fused = dense_ggnn_reference_fused(x, adj, weight, weight_ih, weight_hh,
                                           bias_ih, bias_hh)
    assert jnp.allclose(out, ref_fused, atol=2e-3, rtol=2e-3), \
        float(jnp.max(jnp.abs(out - ref_fused)))

    # Semantic check vs. exact f32 GatedGraphConv+GRUCell math (tolerance loosened
    # because the kernel uses bf16 MXU operands and a folded gate weight).
    ref_f32 = dense_ggnn_reference(x, adj, weight, weight_ih, weight_hh,
                                   bias_ih, bias_hh)
    rel = float(jnp.linalg.norm(out - ref_f32) / jnp.linalg.norm(ref_f32))
    assert rel < 3e-2, rel

    print("KERNEL_OK")
</pallas_src>

<mosaic_0001>
module attributes {stable_mosaic.version = 11 : i64} {
  func.func @_ggnn_kernel(%arg0: i32, %arg1: memref<1x128x32xf32, #tpu.memory_space<vmem>>, %arg2: memref<1x128x128xbf16, #tpu.memory_space<vmem>>, %arg3: memref<2x32x128xbf16, #tpu.memory_space<vmem>>, %arg4: memref<32x128xbf16, #tpu.memory_space<vmem>>, %arg5: memref<1x128xf32, #tpu.memory_space<vmem>>, %arg6: memref<1x128x32xf32, #tpu.memory_space<vmem>>) attributes {dimension_semantics = [#tpu.dimension_semantics<parallel>], iteration_bounds = array<i64: 1>, scalar_prefetch = 0 : i64, scratch_operands = 0 : i64, tpu.core_type = #tpu.core_type<tc>, window_params = [{transform_indices = @transform_0, window_bounds = array<i64: 1, 128, 32>}, {transform_indices = @transform_1, window_bounds = array<i64: 1, 128, 128>}, {pipeline_mode = #tpu.pipeline_mode<synchronous>, transform_indices = @transform_2, window_bounds = array<i64: 2, 32, 128>}, {pipeline_mode = #tpu.pipeline_mode<synchronous>, transform_indices = @transform_3, window_bounds = array<i64: 32, 128>}, {pipeline_mode = #tpu.pipeline_mode<synchronous>, transform_indices = @transform_4, window_bounds = array<i64: 1, 128>}, {transform_indices = @transform_5, window_bounds = array<i64: 1, 128, 32>}]} {
    %c0 = arith.constant 0 : index
    %c0_0 = arith.constant 0 : index
    %c0_1 = arith.constant 0 : index
    %0 = vector.load %arg1[%c0, %c0_0, %c0_1] : memref<1x128x32xf32, #tpu.memory_space<vmem>>, vector<1x128x32xf32>
    %1 = vector.shape_cast %0 : vector<1x128x32xf32> to vector<128x32xf32>
    %c0_2 = arith.constant 0 : index
    %c0_3 = arith.constant 0 : index
    %c0_4 = arith.constant 0 : index
    %2 = vector.load %arg2[%c0_2, %c0_3, %c0_4] : memref<1x128x128xbf16, #tpu.memory_space<vmem>>, vector<1x128x128xbf16>
    %3 = vector.shape_cast %2 : vector<1x128x128xbf16> to vector<128x128xbf16>
    %c0_5 = arith.constant 0 : index
    %c0_6 = arith.constant 0 : index
    %4 = vector.load %arg4[%c0_5, %c0_6] : memref<32x128xbf16, #tpu.memory_space<vmem>>, vector<32x128xbf16>
    %c0_7 = arith.constant 0 : index
    %c0_8 = arith.constant 0 : index
    %5 = vector.load %arg5[%c0_7, %c0_8] : memref<1x128xf32, #tpu.memory_space<vmem>>, vector<1x128xf32>
    %6 = arith.truncf %1 : vector<128x32xf32> to vector<128x32xbf16>
    %cst = arith.constant dense<0.000000e+00> : vector<128x32xf32>
    %7 = tpu.matmul %3, %6, %cst {dimension_numbers = #tpu.dot_dimension_numbers<[1], [0], [0], [1], [0, 0, 1, 1], [], []>} : vector<128x128xbf16>, vector<128x32xbf16>, vector<128x32xf32> -> vector<128x32xf32>
    %cst_9 = arith.constant dense<0.000000e+00> : vector<128x128xf32>
    %8 = tpu.matmul %6, %4, %cst_9 {dimension_numbers = #tpu.dot_dimension_numbers<[1], [0], [0], [1], [0, 0, 1, 1], [], []>} : vector<128x32xbf16>, vector<32x128xbf16>, vector<128x128xf32> -> vector<128x128xf32>
    %9 = arith.truncf %7 : vector<128x32xf32> to vector<128x32xbf16>
    %c0_10 = arith.constant 0 : index
    %c0_11 = arith.constant 0 : index
    %c0_12 = arith.constant 0 : index
    %10 = vector.load %arg3[%c0_10, %c0_11, %c0_12] : memref<2x32x128xbf16, #tpu.memory_space<vmem>>, vector<1x32x128xbf16>
    %11 = vector.shape_cast %10 : vector<1x32x128xbf16> to vector<32x128xbf16>
    %cst_13 = arith.constant dense<0.000000e+00> : vector<128x128xf32>
    %12 = tpu.matmul %9, %11, %cst_13 {dimension_numbers = #tpu.dot_dimension_numbers<[1], [0], [0], [1], [0, 0, 1, 1], [], []>} : vector<128x32xbf16>, vector<32x128xbf16>, vector<128x128xf32> -> vector<128x128xf32>
    %13 = arith.addf %8, %12 : vector<128x128xf32>
    %14 = vector.broadcast %5 : vector<1x128xf32> to vector<128x128xf32>
    %15 = arith.addf %13, %14 : vector<128x128xf32>
    %16 = vector.extract_strided_slice %15 {offsets = [0, 0], sizes = [128, 64], strides = [1, 1]} : vector<128x128xf32> to vector<128x64xf32>
    %17 = arith.negf %16 : vector<128x64xf32>
    %18 = math.exp %17 : vector<128x64xf32>
    %cst_14 = arith.constant 1.000000e+00 : f32
    %19 = vector.broadcast %cst_14 : f32 to vector<128x64xf32>
    %20 = arith.addf %19, %18 : vector<128x64xf32>
    %21 = arith.divf %19, %20 : vector<128x64xf32>
    %22 = vector.extract_strided_slice %21 {offsets = [0, 0], sizes = [128, 32], strides = [1, 1]} : vector<128x64xf32> to vector<128x32xf32>
    %23 = vector.extract_strided_slice %21 {offsets = [0, 32], sizes = [128, 32], strides = [1, 1]} : vector<128x64xf32> to vector<128x32xf32>
    %24 = vector.extract_strided_slice %15 {offsets = [0, 64], sizes = [128, 32], strides = [1, 1]} : vector<128x128xf32> to vector<128x32xf32>
    %25 = vector.extract_strided_slice %15 {offsets = [0, 96], sizes = [128, 32], strides = [1, 1]} : vector<128x128xf32> to vector<128x32xf32>
    %26 = arith.mulf %22, %25 : vector<128x32xf32>
    %27 = arith.addf %24, %26 : vector<128x32xf32>
    %28 = math.tanh %27 : vector<128x32xf32>
    %cst_15 = arith.constant 1.000000e+00 : f32
    %29 = vector.broadcast %cst_15 : f32 to vector<128x32xf32>
    %30 = arith.subf %29, %23 : vector<128x32xf32>
    %31 = arith.mulf %30, %28 : vector<128x32xf32>
    %32 = arith.mulf %23, %1 : vector<128x32xf32>
    %33 = arith.addf %31, %32 : vector<128x32xf32>
    %34 = arith.truncf %33 : vector<128x32xf32> to vector<128x32xbf16>
    %cst_16 = arith.constant dense<0.000000e+00> : vector<128x32xf32>
    %35 = tpu.matmul %3, %34, %cst_16 {dimension_numbers = #tpu.dot_dimension_numbers<[1], [0], [0], [1], [0, 0, 1, 1], [], []>} : vector<128x128xbf16>, vector<128x32xbf16>, vector<128x32xf32> -> vector<128x32xf32>
    %cst_17 = arith.constant dense<0.000000e+00> : vector<128x128xf32>
    %36 = tpu.matmul %34, %4, %cst_17 {dimension_numbers = #tpu.dot_dimension_numbers<[1], [0], [0], [1], [0, 0, 1, 1], [], []>} : vector<128x32xbf16>, vector<32x128xbf16>, vector<128x128xf32> -> vector<128x128xf32>
    %37 = arith.truncf %35 : vector<128x32xf32> to vector<128x32xbf16>
    %c1 = arith.constant 1 : index
    %c0_18 = arith.constant 0 : index
    %c0_19 = arith.constant 0 : index
    %38 = vector.load %arg3[%c1, %c0_18, %c0_19] : memref<2x32x128xbf16, #tpu.memory_space<vmem>>, vector<1x32x128xbf16>
    %39 = vector.shape_cast %38 : vector<1x32x128xbf16> to vector<32x128xbf16>
    %cst_20 = arith.constant dense<0.000000e+00> : vector<128x128xf32>
    %40 = tpu.matmul %37, %39, %cst_20 {dimension_numbers = #tpu.dot_dimension_numbers<[1], [0], [0], [1], [0, 0, 1, 1], [], []>} : vector<128x32xbf16>, vector<32x128xbf16>, vector<128x128xf32> -> vector<128x128xf32>
    %41 = arith.addf %36, %40 : vector<128x128xf32>
    %42 = vector.broadcast %5 : vector<1x128xf32> to vector<128x128xf32>
    %43 = arith.addf %41, %42 : vector<128x128xf32>
    %44 = vector.extract_strided_slice %43 {offsets = [0, 0], sizes = [128, 64], strides = [1, 1]} : vector<128x128xf32> to vector<128x64xf32>
    %45 = arith.negf %44 : vector<128x64xf32>
    %46 = math.exp %45 : vector<128x64xf32>
    %cst_21 = arith.constant 1.000000e+00 : f32
    %47 = vector.broadcast %cst_21 : f32 to vector<128x64xf32>
    %48 = arith.addf %47, %46 : vector<128x64xf32>
    %49 = arith.divf %47, %48 : vector<128x64xf32>
    %50 = vector.extract_strided_slice %49 {offsets = [0, 0], sizes = [128, 32], strides = [1, 1]} : vector<128x64xf32> to vector<128x32xf32>
    %51 = vector.extract_strided_slice %49 {offsets = [0, 32], sizes = [128, 32], strides = [1, 1]} : vector<128x64xf32> to vector<128x32xf32>
    %52 = vector.extract_strided_slice %43 {offsets = [0, 64], sizes = [128, 32], strides = [1, 1]} : vector<128x128xf32> to vector<128x32xf32>
    %53 = vector.extract_strided_slice %43 {offsets = [0, 96], sizes = [128, 32], strides = [1, 1]} : vector<128x128xf32> to vector<128x32xf32>
    %54 = arith.mulf %50, %53 : vector<128x32xf32>
    %55 = arith.addf %52, %54 : vector<128x32xf32>
    %56 = math.tanh %55 : vector<128x32xf32>
    %cst_22 = arith.constant 1.000000e+00 : f32
    %57 = vector.broadcast %cst_22 : f32 to vector<128x32xf32>
    %58 = arith.subf %57, %51 : vector<128x32xf32>
    %59 = arith.mulf %58, %56 : vector<128x32xf32>
    %60 = arith.mulf %51, %33 : vector<128x32xf32>
    %61 = arith.addf %59, %60 : vector<128x32xf32>
    %c0_23 = arith.constant 0 : index
    %c0_24 = arith.constant 0 : index
    %c0_25 = arith.constant 0 : index
    %62 = vector.load %arg6[%c0_23, %c0_24, %c0_25] : memref<1x128x32xf32, #tpu.memory_space<vmem>>, vector<1x128x32xf32>
    %63 = vector.shape_cast %62 : vector<1x128x32xf32> to vector<128x32xf32>
    %64 = vector.shape_cast %61 : vector<128x32xf32> to vector<1x128x32xf32>
    tpu.vector_store %arg6[%c0_23, %c0_24, %c0_25], %64 {strides = array<i32>} : memref<1x128x32xf32, #tpu.memory_space<vmem>>, vector<1x128x32xf32>,
    return
  }
  func.func @transform_0(%arg0: i32) -> (i32, i32, i32) {
    %c0_i32 = arith.constant 0 : i32
    %c0_i32_0 = arith.constant 0 : i32
    %c0_i32_1 = arith.constant 0 : i32
    return %arg0, %c0_i32, %c0_i32_0 : i32, i32, i32
  }
  func.func @transform_1(%arg0: i32) -> (i32, i32, i32) {
    %c0_i32 = arith.constant 0 : i32
    %c0_i32_0 = arith.constant 0 : i32
    %c0_i32_1 = arith.constant 0 : i32
    return %arg0, %c0_i32, %c0_i32_0 : i32, i32, i32
  }
  func.func @transform_2(%arg0: i32) -> (i32, i32, i32) {
    %c0_i32 = arith.constant 0 : i32
    %c0_i32_0 = arith.constant 0 : i32
    %c0_i32_1 = arith.constant 0 : i32
    %c0_i32_2 = arith.constant 0 : i32
    return %c0_i32, %c0_i32_0, %c0_i32_1 : i32, i32, i32
  }
  func.func @transform_3(%arg0: i32) -> (i32, i32) {
    %c0_i32 = arith.constant 0 : i32
    %c0_i32_0 = arith.constant 0 : i32
    %c0_i32_1 = arith.constant 0 : i32
    return %c0_i32, %c0_i32_0 : i32, i32
  }
  func.func @transform_4(%arg0: i32) -> (i32, i32) {
    %c0_i32 = arith.constant 0 : i32
    %c0_i32_0 = arith.constant 0 : i32
    %c0_i32_1 = arith.constant 0 : i32
    return %c0_i32, %c0_i32_0 : i32, i32
  }
  func.func @transform_5(%arg0: i32) -> (i32, i32, i32) {
    %c0_i32 = arith.constant 0 : i32
    %c0_i32_0 = arith.constant 0 : i32
    %c0_i32_1 = arith.constant 0 : i32
    return %arg0, %c0_i32, %c0_i32_0 : i32, i32, i32
  }
}

</mosaic_0001>

<llo_original>
// kernel: dense_ggnn_forward.1
$region0: #{dense_ggnn_forward.1}
  #allocation0 [shape = 'u32[]', space=smem, size = 0x4, offset = 0x4, fixed_abs, tag = 'smem constant byte address 0x4 - core index']
  #allocation1 [shape = 'u32[144,128]{1,0:T(1,128)}', space=vmem, size = 0x12000, scoped, tag = 'internal scratch']
  %s0 = inlined_call_operand.vmem [shape: f32[1,128,32], index: 0, kind: input, shape index: {}]
  %s1 = inlined_call_operand.vmem [shape: bf16[1,128,128], index: 1, kind: input, shape index: {}]
  %s2 = inlined_call_operand.vmem [shape: bf16[2,32,128], index: 2, kind: input, shape index: {}]
  %s3 = inlined_call_operand.vmem [shape: bf16[32,128], index: 3, kind: input, shape index: {}]
  %s4 = inlined_call_operand.vmem [shape: f32[1,128], index: 4, kind: input, shape index: {}]
  %s5 = inlined_call_operand.hbm [shape: f32[1,128,32], index: 5, kind: output, shape index: {}]
  %s6 = sld [smem:[#allocation0]]
  $region30: #{dense_ggnn_forward.1} parent=0
    _
  %s8 = ssub.s32 1, %s6
  %s9 = scalar_select 0, %s8, %s6
  $region1: #{dense_ggnn_forward.1} parent=0
    #allocation2 [shape = 'u8[65536]{0}', space=vmem, size = 0x10000, scoped, tag = 'output window, operand 0, single buffered']
    #allocation3 [shape = 's32[1]{0}', space=sflag, size = 0x4, scoped, tag = 'scoped memory for dense_ggnn_forward.1']
    %10 = vsyncpa [#allocation3], 0
    // Predicated region
    $region2: #{dense_ggnn_forward.1} parent=1 // pred_check
      _
    $region3: #{dense_ggnn_forward.1} parent=1 // pred_check_branch
      %12 = sbr.rel (0) target = $region5
    $region4: #{dense_ggnn_forward.1} parent=1 // pred_region
      _
    $region5: #{dense_ggnn_forward.1} parent=1 // pred_fallthru
      _
    // Predicated region
    $region6: #{dense_ggnn_forward.1} parent=1 // pred_check
      _
    $region7: #{dense_ggnn_forward.1} parent=1 // pred_check_branch
      %14 = sbr.rel (0) target = $region9
    $region8: #{dense_ggnn_forward.1} parent=1 // pred_region
      _
    $region9: #{dense_ggnn_forward.1} parent=1 // pred_fallthru
      _
    // Predicated region
    $region10: #{dense_ggnn_forward.1} parent=1 // pred_check
      _
    $region11: #{dense_ggnn_forward.1} parent=1 // pred_check_branch
      %16 = sbr.rel (0) target = $region13
    $region12: #{dense_ggnn_forward.1} parent=1 // pred_region
      _
    $region13: #{dense_ggnn_forward.1} parent=1 // pred_fallthru
      _
    // Predicated region
    $region14: #{dense_ggnn_forward.1} parent=1 // pred_check
      _
    $region15: #{dense_ggnn_forward.1} parent=1 // pred_check_branch
      %18 = sbr.rel (0) target = $region17
    $region16: #{dense_ggnn_forward.1} parent=1 // pred_region
      _
    $region17: #{dense_ggnn_forward.1} parent=1 // pred_fallthru
      _
    // Predicated region
    $region18: #{dense_ggnn_forward.1} parent=1 // pred_check
      _
    $region19: #{dense_ggnn_forward.1} parent=1 // pred_check_branch
      %20 = sbr.rel (0) target = $region21
    $region20: #{dense_ggnn_forward.1} parent=1 // pred_region
      _
    $region21: #{dense_ggnn_forward.1} parent=1 // pred_fallthru
      _
    %v22 = vld [vmem:[%s0] sm:$0xff]
    %v23 = vld [vmem:[%s0 + $0x8] sm:$0xff]
    %v24 = vld [vmem:[%s0 + $0x10] sm:$0xff]
    %v25 = vld [vmem:[%s0 + $0x18] sm:$0xff]
    %v26 = vld [vmem:[%s0 + $0x20] sm:$0xff]
    %v27 = vld [vmem:[%s0 + $0x28] sm:$0xff]
    %v28 = vld [vmem:[%s0 + $0x30] sm:$0xff]
    %v29 = vld [vmem:[%s0 + $0x38] sm:$0xff]
    %v30 = vld [vmem:[%s0 + $0x40] sm:$0xff]
    %v31 = vld [vmem:[%s0 + $0x48] sm:$0xff]
    %v32 = vld [vmem:[%s0 + $0x50] sm:$0xff]
    %v33 = vld [vmem:[%s0 + $0x58] sm:$0xff]
    %v34 = vld [vmem:[%s0 + $0x60] sm:$0xff]
    %v35 = vld [vmem:[%s0 + $0x68] sm:$0xff]
    %v36 = vld [vmem:[%s0 + $0x70] sm:$0xff]
    %v37 = vld [vmem:[%s0 + $0x78] sm:$0xff]
    %v38 = vld [vmem:[%s1] sm:$0xf]
    %v39 = vld [vmem:[%s1 + $0x4] sm:$0xf]
    %v40 = vld [vmem:[%s1 + $0x8] sm:$0xf]
    %v41 = vld [vmem:[%s1 + $0xc] sm:$0xf]
    %v42 = vld [vmem:[%s1 + $0x10] sm:$0xf]
    %v43 = vld [vmem:[%s1 + $0x14] sm:$0xf]
    %v44 = vld [vmem:[%s1 + $0x18] sm:$0xf]
    %v45 = vld [vmem:[%s1 + $0x1c] sm:$0xf]
    %v46 = vld [vmem:[%s1 + $0x20] sm:$0xf]
    %v47 = vld [vmem:[%s1 + $0x24] sm:$0xf]
    %v48 = vld [vmem:[%s1 + $0x28] sm:$0xf]
    %v49 = vld [vmem:[%s1 + $0x2c] sm:$0xf]
    %v50 = vld [vmem:[%s1 + $0x30] sm:$0xf]
    %v51 = vld [vmem:[%s1 + $0x34] sm:$0xf]
    %v52 = vld [vmem:[%s1 + $0x38] sm:$0xf]
    %v53 = vld [vmem:[%s1 + $0x3c] sm:$0xf]
    %v54 = vld [vmem:[%s3] sm:$0xf]
    %v55 = vld [vmem:[%s3 + $0x4] sm:$0xf]
    %v56 = vld [vmem:[%s3 + $0x8] sm:$0xf]
    %v57 = vld [vmem:[%s3 + $0xc] sm:$0xf]
    %v58 = vld [vmem:[%s4] sm:$0x1]
    %v59 = vpack.c.bf16 %v23, %v22
    %v60 = vpack.c.bf16 %v25, %v24
    %v61 = vpack.c.bf16 %v27, %v26
    %v62 = vpack.c.bf16 %v29, %v28
    %v63 = vpack.c.bf16 %v31, %v30
    %v64 = vpack.c.bf16 %v33, %v32
    %v65 = vpack.c.bf16 %v35, %v34
    %v66 = vpack.c.bf16 %v37, %v36
    %v83 = vunpack.c.l.b16 %v38
    %v84 = vunpack.c.l.b16 %v39
    %v85 = vunpack.c.l.b16 %v40
    %v86 = vunpack.c.l.b16 %v41
    %v87 = vunpack.c.l.b16 %v42
    %v88 = vunpack.c.l.b16 %v43
    %v89 = vunpack.c.l.b16 %v44
    %v90 = vunpack.c.l.b16 %v45
    %v91 = vunpack.c.l.b16 %v46
    %v92 = vunpack.c.l.b16 %v47
    %v93 = vunpack.c.l.b16 %v48
    %v94 = vunpack.c.l.b16 %v49
    %v95 = vunpack.c.l.b16 %v50
    %v96 = vunpack.c.l.b16 %v51
    %v97 = vunpack.c.l.b16 %v52
    %v98 = vunpack.c.l.b16 %v53
    %v99 = vpack.c.b16 %v84, %v83
    %v100 = vpack.c.b16 %v86, %v85
    %v101 = vpack.c.b16 %v88, %v87
    %v102 = vpack.c.b16 %v90, %v89
    %v103 = vpack.c.b16 %v92, %v91
    %v104 = vpack.c.b16 %v94, %v93
    %v105 = vpack.c.b16 %v96, %v95
    %v106 = vpack.c.b16 %v98, %v97
    %115 = vmatprep.subr.bf16.mxu0 0
    %116 = vmatpush1.bf16.msra.mxu0 %v59
    %117 = vmatprep.subr.bf16.mxu0 0
    %118 = vmatpush1.bf16.msra.mxu0 %v60
    %119 = vmatprep.subr.bf16.mxu0 0
    %120 = vmatpush1.bf16.msra.mxu0 %v61
    %121 = vmatprep.subr.bf16.mxu0 0
    %122 = vmatpush1.bf16.msra.mxu0 %v62
    %123 = vmatprep.subr.bf16.mxu0 0
    %124 = vmatpush1.bf16.msra.mxu0 %v63
    %125 = vmatprep.subr.bf16.mxu0 0
    %126 = vmatpush1.bf16.msra.mxu0 %v64
    %127 = vmatprep.subr.bf16.mxu0 0
    %128 = vmatpush1.bf16.msra.mxu0 %v65
    %129 = vmatprep.subr.bf16.mxu0 0
    %130 = vmatpush1.bf16.msra.mxu0 %v66
    %131 = vmatprep.subr.bf16.mxu0 0
    %132 = vmatpush1.bf16.msra.mxu0 0
    %133 = vmatprep.subr.bf16.mxu0 0
    %134 = vmatpush1.bf16.msra.mxu0 0
    %135 = vmatprep.subr.bf16.mxu0 0
    %136 = vmatpush1.bf16.msra.mxu0 0
    %137 = vmatprep.subr.bf16.mxu0 0
    %138 = vmatpush1.bf16.msra.mxu0 0
    %139 = vmatprep.subr.bf16.mxu0 0
    %140 = vmatpush1.bf16.msra.mxu0 0
    %141 = vmatprep.subr.bf16.mxu0 0
    %142 = vmatpush1.bf16.msra.mxu0 0
    %143 = vmatprep.subr.bf16.mxu0 0
    %144 = vmatpush1.bf16.msra.mxu0 0
    %145 = vmatprep.subr.bf16.mxu0 0
    %146 = vmatpush1.bf16.msra.mxu0 0
    %147 = vmatprep.mubr.bf16.mxu0 0
    %148 = vmatmul.mubr.bf16.gmra.mrb[0].mxu0 %v99
    %v149 = vpop.f32.mrb[0].mxu0
    %v150 = vadd.f32 0.0, %v149
    %v151 = vpop.f32.mrb[0].mxu0
    %v152 = vpop.f32.mrb[0].mxu0
    %v153 = vadd.f32 0.0, %v152
    %v154 = vpop.f32.mrb[0].mxu0
    %155 = vmatprep.mubr.bf16.mxu0 0
    %156 = vmatmul.mubr.bf16.gmra.mrb[0].mxu0 %v100
    %v157 = vpop.f32.mrb[0].mxu0
    %v158 = vadd.f32 0.0, %v157
    %v159 = vpop.f32.mrb[0].mxu0
    %v160 = vpop.f32.mrb[0].mxu0
    %v161 = vadd.f32 0.0, %v160
    %v162 = vpop.f32.mrb[0].mxu0
    %163 = vmatprep.mubr.bf16.mxu0 0
    %164 = vmatmul.mubr.bf16.gmra.mrb[0].mxu0 %v101
    %v165 = vpop.f32.mrb[0].mxu0
    %v166 = vadd.f32 0.0, %v165
    %v167 = vpop.f32.mrb[0].mxu0
    %v168 = vpop.f32.mrb[0].mxu0
    %v169 = vadd.f32 0.0, %v168
    %v170 = vpop.f32.mrb[0].mxu0
    %171 = vmatprep.mubr.bf16.mxu0 0
    %172 = vmatmul.mubr.bf16.gmra.mrb[0].mxu0 %v102
    %v173 = vpop.f32.mrb[0].mxu0
    %v174 = vadd.f32 0.0, %v173
    %v175 = vpop.f32.mrb[0].mxu0
    %v176 = vpop.f32.mrb[0].mxu0
    %v177 = vadd.f32 0.0, %v176
    %v178 = vpop.f32.mrb[0].mxu0
    %179 = vmatprep.mubr.bf16.mxu0 0
    %180 = vmatmul.mubr.bf16.gmra.mrb[0].mxu0 %v103
    %v181 = vpop.f32.mrb[0].mxu0
    %v182 = vadd.f32 0.0, %v181
    %v183 = vpop.f32.mrb[0].mxu0
    %v184 = vpop.f32.mrb[0].mxu0
    %v185 = vadd.f32 0.0, %v184
    %v186 = vpop.f32.mrb[0].mxu0
    %187 = vmatprep.mubr.bf16.mxu0 0
    %188 = vmatmul.mubr.bf16.gmra.mrb[0].mxu0 %v104
    %v189 = vpop.f32.mrb[0].mxu0
    %v190 = vadd.f32 0.0, %v189
    %v191 = vpop.f32.mrb[0].mxu0
    %v192 = vpop.f32.mrb[0].mxu0
    %v193 = vadd.f32 0.0, %v192
    %v194 = vpop.f32.mrb[0].mxu0
    %195 = vmatprep.mubr.bf16.mxu0 0
    %196 = vmatmul.mubr.bf16.gmra.mrb[0].mxu0 %v105
    %v197 = vpop.f32.mrb[0].mxu0
    %v198 = vadd.f32 0.0, %v197
    %v199 = vpop.f32.mrb[0].mxu0
    %v200 = vpop.f32.mrb[0].mxu0
    %v201 = vadd.f32 0.0, %v200
    %v202 = vpop.f32.mrb[0].mxu0
    %203 = vmatprep.mubr.bf16.mxu0 0
    %204 = vmatmul.mubr.bf16.gmra.mrb[0].mxu0 %v106
    %v205 = vpop.f32.mrb[0].mxu0
    %v206 = vadd.f32 0.0, %v205
    %v207 = vpop.f32.mrb[0].mxu0
    %v208 = vpop.f32.mrb[0].mxu0
    %v209 = vadd.f32 0.0, %v208
    %v210 = vpop.f32.mrb[0].mxu0
    %211 = vdwg.mxu0
    %v212 = vpack.c.bf16 %v153, %v150
    %v213 = vpack.c.bf16 %v161, %v158
    %v214 = vpack.c.bf16 %v169, %v166
    %v215 = vpack.c.bf16 %v177, %v174
    %v216 = vpack.c.bf16 %v185, %v182
    %v217 = vpack.c.bf16 %v193, %v190
    %v218 = vpack.c.bf16 %v201, %v198
    %v219 = vpack.c.bf16 %v209, %v206
    %v220 = vld [vmem:[%s2] sm:$0xf]
    %v221 = vld [vmem:[%s2 + $0x4] sm:$0xf]
    %v222 = vld [vmem:[%s2 + $0x8] sm:$0xf]
    %v223 = vld [vmem:[%s2 + $0xc] sm:$0xf]
    %v228 = vunpack.c.l.b16 %v220
    %v229 = vunpack.c.l.b16 %v221
    %v230 = vunpack.c.l.b16 %v222
    %v231 = vunpack.c.l.b16 %v223
    %v232 = vpack.c.b16 %v229, %v228
    %v233 = vpack.c.b16 %v231, %v230
    %vm236 = vcmask 261120
    %v238 = vsel %vm236, %v212, 0
    %v241 = vsel %vm236, %v213, 0
    %v244 = vsel %vm236, %v214, 0
    %v247 = vsel %vm236, %v215, 0
    %v250 = vsel %vm236, %v216, 0
    %v253 = vsel %vm236, %v217, 0
    %v256 = vsel %vm236, %v218, 0
    %v259 = vsel %vm236, %v219, 0
    %261 = vmatprep.subr.bf16.mxu0 0
    %262 = vmatpush1.bf16.msra.mxu0 %v232
    %263 = vmatprep.subr.bf16.mxu0 0
    %264 = vmatpush1.bf16.msra.mxu0 %v233
    %265 = vmatprep.subr.bf16.mxu0 0
    %266 = vmatpush1.bf16.msra.mxu0 0
    %267 = vmatprep.subr.bf16.mxu0 0
    %268 = vmatpush1.bf16.msra.mxu0 0
    %269 = vmatprep.subr.bf16.mxu0 0
    %270 = vmatpush1.bf16.msra.mxu0 0
    %271 = vmatprep.subr.bf16.mxu0 0
    %272 = vmatpush1.bf16.msra.mxu0 0
    %273 = vmatprep.subr.bf16.mxu0 0
    %274 = vmatpush1.bf16.msra.mxu0 0
    %275 = vmatprep.subr.bf16.mxu0 0
    %276 = vmatpush1.bf16.msra.mxu0 0
    %277 = vmatprep.subr.bf16.mxu0 0
    %278 = vmatpush1.bf16.msra.mxu0 0
    %279 = vmatprep.subr.bf16.mxu0 0
    %280 = vmatpush1.bf16.msra.mxu0 0
    %281 = vmatprep.subr.bf16.mxu0 0
    %282 = vmatpush1.bf16.msra.mxu0 0
    %283 = vmatprep.subr.bf16.mxu0 0
    %284 = vmatpush1.bf16.msra.mxu0 0
    %285 = vmatprep.subr.bf16.mxu0 0
    %286 = vmatpush1.bf16.msra.mxu0 0
    %287 = vmatprep.subr.bf16.mxu0 0
    %288 = vmatpush1.bf16.msra.mxu0 0
    %289 = vmatprep.subr.bf16.mxu0 0
    %290 = vmatpush1.bf16.msra.mxu0 0
    %291 = vmatprep.subr.bf16.mxu0 0
    %292 = vmatpush1.bf16.msra.mxu0 0
    %293 = vmatprep.mubr.bf16.mxu0 0
    %294 = vmatmul.mubr.bf16.gmra.mrb[0].mxu0 %v238
    %v295 = vpop.f32.mrb[0].mxu0
    %v296 = vadd.f32 0.0, %v295
    %v297 = vpop.f32.mrb[0].mxu0
    %v298 = vpop.f32.mrb[0].mxu0
    %v299 = vadd.f32 0.0, %v298
    %v300 = vpop.f32.mrb[0].mxu0
    %301 = vmatprep.mubr.bf16.mxu0 0
    %302 = vmatmul.mubr.bf16.gmra.mrb[0].mxu0 %v241
    %v303 = vpop.f32.mrb[0].mxu0
    %v304 = vadd.f32 0.0, %v303
    %v305 = vpop.f32.mrb[0].mxu0
    %v306 = vpop.f32.mrb[0].mxu0
    %v307 = vadd.f32 0.0, %v306
    %v308 = vpop.f32.mrb[0].mxu0
    %309 = vmatprep.mubr.bf16.mxu0 0
    %310 = vmatmul.mubr.bf16.gmra.mrb[0].mxu0 %v244
    %v311 = vpop.f32.mrb[0].mxu0
    %v312 = vadd.f32 0.0, %v311
    %v313 = vpop.f32.mrb[0].mxu0
    %v314 = vpop.f32.mrb[0].mxu0
    %v315 = vadd.f32 0.0, %v314
    %v316 = vpop.f32.mrb[0].mxu0
    %317 = vmatprep.mubr.bf16.mxu0 0
    %318 = vmatmul.mubr.bf16.gmra.mrb[0].mxu0 %v247
    %v319 = vpop.f32.mrb[0].mxu0
    %v320 = vadd.f32 0.0, %v319
    %v321 = vpop.f32.mrb[0].mxu0
    %v322 = vpop.f32.mrb[0].mxu0
    %v323 = vadd.f32 0.0, %v322
    %v324 = vpop.f32.mrb[0].mxu0
    %325 = vmatprep.mubr.bf16.mxu0 0
    %326 = vmatmul.mubr.bf16.gmra.mrb[0].mxu0 %v250
    %v327 = vpop.f32.mrb[0].mxu0
    %v328 = vadd.f32 0.0, %v327
    %v329 = vpop.f32.mrb[0].mxu0
    %v330 = vpop.f32.mrb[0].mxu0
    %v331 = vadd.f32 0.0, %v330
    %v332 = vpop.f32.mrb[0].mxu0
    %333 = vmatprep.mubr.bf16.mxu0 0
    %334 = vmatmul.mubr.bf16.gmra.mrb[0].mxu0 %v253
    %v335 = vpop.f32.mrb[0].mxu0
    %v336 = vadd.f32 0.0, %v335
    %v337 = vpop.f32.mrb[0].mxu0
    %v338 = vpop.f32.mrb[0].mxu0
    %v339 = vadd.f32 0.0, %v338
    %v340 = vpop.f32.mrb[0].mxu0
    %341 = vmatprep.mubr.bf16.mxu0 0
    %342 = vmatmul.mubr.bf16.gmra.mrb[0].mxu0 %v256
    %v343 = vpop.f32.mrb[0].mxu0
    %v344 = vadd.f32 0.0, %v343
    %v345 = vpop.f32.mrb[0].mxu0
    %v346 = vpop.f32.mrb[0].mxu0
    %v347 = vadd.f32 0.0, %v346
    %v348 = vpop.f32.mrb[0].mxu0
    %349 = vmatprep.mubr.bf16.mxu0 0
    %350 = vmatmul.mubr.bf16.gmra.mrb[0].mxu0 %v259
    %v351 = vpop.f32.mrb[0].mxu0
    %v352 = vadd.f32 0.0, %v351
    %v353 = vpop.f32.mrb[0].mxu0
    %v354 = vpop.f32.mrb[0].mxu0
    %v355 = vadd.f32 0.0, %v354
    %v356 = vpop.f32.mrb[0].mxu0
    %357 = vdwg.mxu0
    %v362 = vunpack.c.l.b16 %v54
    %v363 = vunpack.c.l.b16 %v55
    %v364 = vunpack.c.l.b16 %v56
    %v365 = vunpack.c.l.b16 %v57
    %v366 = vpack.c.b16 %v363, %v362
    %v367 = vpack.c.b16 %v365, %v364
    %v371 = vsel %vm236, %v59, 0
    %v374 = vsel %vm236, %v60, 0
    %v377 = vsel %vm236, %v61, 0
    %v380 = vsel %vm236, %v62, 0
    %v383 = vsel %vm236, %v63, 0
    %v386 = vsel %vm236, %v64, 0
    %v389 = vsel %vm236, %v65, 0
    %v392 = vsel %vm236, %v66, 0
    %394 = vmatprep.subr.bf16.mxu0 0
    %395 = vmatpush1.bf16.msra.mxu0 %v366
    %396 = vmatprep.subr.bf16.mxu0 0
    %397 = vmatpush1.bf16.msra.mxu0 %v367
    %398 = vmatprep.subr.bf16.mxu0 0
    %399 = vmatpush1.bf16.msra.mxu0 0
    %400 = vmatprep.subr.bf16.mxu0 0
    %401 = vmatpush1.bf16.msra.mxu0 0
    %402 = vmatprep.subr.bf16.mxu0 0
    %403 = vmatpush1.bf16.msra.mxu0 0
    %404 = vmatprep.subr.bf16.mxu0 0
    %405 = vmatpush1.bf16.msra.mxu0 0
    %406 = vmatprep.subr.bf16.mxu0 0
    %407 = vmatpush1.bf16.msra.mxu0 0
    %408 = vmatprep.subr.bf16.mxu0 0
    %409 = vmatpush1.bf16.msra.mxu0 0
    %410 = vmatprep.subr.bf16.mxu0 0
    %411 = vmatpush1.bf16.msra.mxu0 0
    %412 = vmatprep.subr.bf16.mxu0 0
    %413 = vmatpush1.bf16.msra.mxu0 0
    %414 = vmatprep.subr.bf16.mxu0 0
    %415 = vmatpush1.bf16.msra.mxu0 0
    %416 = vmatprep.subr.bf16.mxu0 0
    %417 = vmatpush1.bf16.msra.mxu0 0
    %418 = vmatprep.subr.bf16.mxu0 0
    %419 = vmatpush1.bf16.msra.mxu0 0
    %420 = vmatprep.subr.bf16.mxu0 0
    %421 = vmatpush1.bf16.msra.mxu0 0
    %422 = vmatprep.subr.bf16.mxu0 0
    %423 = vmatpush1.bf16.msra.mxu0 0
    %424 = vmatprep.subr.bf16.mxu0 0
    %425 = vmatpush1.bf16.msra.mxu0 0
    %426 = vmatprep.mubr.bf16.mxu0 0
    %427 = vmatmul.mubr.bf16.gmra.mrb[0].mxu0 %v371
    %v428 = vpop.f32.mrb[0].mxu0
    %v429 = vadd.f32 %v296, %v428
    %v430 = vpop.f32.mrb[0].mxu0
    %v431 = vpop.f32.mrb[0].mxu0
    %v432 = vadd.f32 %v299, %v431
    %v433 = vpop.f32.mrb[0].mxu0
    %434 = vmatprep.mubr.bf16.mxu0 0
    %435 = vmatmul.mubr.bf16.gmra.mrb[0].mxu0 %v374
    %v436 = vpop.f32.mrb[0].mxu0
    %v437 = vadd.f32 %v304, %v436
    %v438 = vpop.f32.mrb[0].mxu0
    %v439 = vpop.f32.mrb[0].mxu0
    %v440 = vadd.f32 %v307, %v439
    %v441 = vpop.f32.mrb[0].mxu0
    %442 = vmatprep.mubr.bf16.mxu0 0
    %443 = vmatmul.mubr.bf16.gmra.mrb[0].mxu0 %v377
    %v444 = vpop.f32.mrb[0].mxu0
    %v445 = vadd.f32 %v312, %v444
    %v446 = vpop.f32.mrb[0].mxu0
    %v447 = vpop.f32.mrb[0].mxu0
    %v448 = vadd.f32 %v315, %v447
    %v449 = vpop.f32.mrb[0].mxu0
    %450 = vmatprep.mubr.bf16.mxu0 0
    %451 = vmatmul.mubr.bf16.gmra.mrb[0].mxu0 %v380
    %v452 = vpop.f32.mrb[0].mxu0
    %v453 = vadd.f32 %v320, %v452
    %v454 = vpop.f32.mrb[0].mxu0
    %v455 = vpop.f32.mrb[0].mxu0
    %v456 = vadd.f32 %v323, %v455
    %v457 = vpop.f32.mrb[0].mxu0
    %458 = vmatprep.mubr.bf16.mxu0 0
    %459 = vmatmul.mubr.bf16.gmra.mrb[0].mxu0 %v383
    %v460 = vpop.f32.mrb[0].mxu0
    %v461 = vadd.f32 %v328, %v460
    %v462 = vpop.f32.mrb[0].mxu0
    %v463 = vpop.f32.mrb[0].mxu0
    %v464 = vadd.f32 %v331, %v463
    %v465 = vpop.f32.mrb[0].mxu0
    %466 = vmatprep.mubr.bf16.mxu0 0
    %467 = vmatmul.mubr.bf16.gmra.mrb[0].mxu0 %v386
    %v468 = vpop.f32.mrb[0].mxu0
    %v469 = vadd.f32 %v336, %v468
    %v470 = vpop.f32.mrb[0].mxu0
    %v471 = vpop.f32.mrb[0].mxu0
    %v472 = vadd.f32 %v339, %v471
    %v473 = vpop.f32.mrb[0].mxu0
    %474 = vmatprep.mubr.bf16.mxu0 0
    %475 = vmatmul.mubr.bf16.gmra.mrb[0].mxu0 %v389
    %v476 = vpop.f32.mrb[0].mxu0
    %v477 = vadd.f32 %v344, %v476
    %v478 = vpop.f32.mrb[0].mxu0
    %v479 = vpop.f32.mrb[0].mxu0
    %v480 = vadd.f32 %v347, %v479
    %v481 = vpop.f32.mrb[0].mxu0
    %482 = vmatprep.mubr.bf16.mxu0 0
    %483 = vmatmul.mubr.bf16.gmra.mrb[0].mxu0 %v392
    %v484 = vpop.f32.mrb[0].mxu0
    %v485 = vadd.f32 %v352, %v484
    %v486 = vpop.f32.mrb[0].mxu0
    %v487 = vpop.f32.mrb[0].mxu0
    %v488 = vadd.f32 %v355, %v487
    %v489 = vpop.f32.mrb[0].mxu0
    %490 = vdwg.mxu0
    %v492 = vlaneseq
    %v493 = vshrl.u32 %v492, 7
    %v494 = vsub.s32 0, %v493
    %v495 = vrot.slane %v58, %v494
    %v497 = vadd.f32 %v429, %v495
    %v498 = vadd.f32 %v432, %v495
    %v499 = vadd.f32 %v437, %v495
    %v500 = vadd.f32 %v440, %v495
    %v501 = vadd.f32 %v445, %v495
    %v502 = vadd.f32 %v448, %v495
    %v503 = vadd.f32 %v453, %v495
    %v504 = vadd.f32 %v456, %v495
    %v505 = vadd.f32 %v461, %v495
    %v506 = vadd.f32 %v464, %v495
    %v507 = vadd.f32 %v469, %v495
    %v508 = vadd.f32 %v472, %v495
    %v509 = vadd.f32 %v477, %v495
    %v510 = vadd.f32 %v480, %v495
    %v511 = vadd.f32 %v485, %v495
    %v512 = vadd.f32 %v488, %v495
    %v513 = vxor.u32 %v497, 2147483648
    %v514 = vxor.u32 %v498, 2147483648
    %v515 = vxor.u32 %v499, 2147483648
    %v516 = vxor.u32 %v500, 2147483648
    %v517 = vxor.u32 %v501, 2147483648
    %v518 = vxor.u32 %v502, 2147483648
    %v519 = vxor.u32 %v503, 2147483648
    %v520 = vxor.u32 %v504, 2147483648
    %v521 = vxor.u32 %v505, 2147483648
    %v522 = vxor.u32 %v506, 2147483648
    %v523 = vxor.u32 %v507, 2147483648
    %v524 = vxor.u32 %v508, 2147483648
    %v525 = vxor.u32 %v509, 2147483648
    %v526 = vxor.u32 %v510, 2147483648
    %v527 = vxor.u32 %v511, 2147483648
    %v528 = vxor.u32 %v512, 2147483648
    %v529 = vmul.f32 %v513, 1.442695
    %v530 = vpow.pop %v529
    %v531 = vmul.f32 %v514, 1.442695
    %v532 = vpow.pop %v531
    %v533 = vmul.f32 %v515, 1.442695
    %v534 = vpow.pop %v533
    %v535 = vmul.f32 %v516, 1.442695
    %v536 = vpow.pop %v535
    %v537 = vmul.f32 %v517, 1.442695
    %v538 = vpow.pop %v537
    %v539 = vmul.f32 %v518, 1.442695
    %v540 = vpow.pop %v539
    %v541 = vmul.f32 %v519, 1.442695
    %v542 = vpow.pop %v541
    %v543 = vmul.f32 %v520, 1.442695
    %v544 = vpow.pop %v543
    %v545 = vmul.f32 %v521, 1.442695
    %v546 = vpow.pop %v545
    %v547 = vmul.f32 %v522, 1.442695
    %v548 = vpow.pop %v547
    %v549 = vmul.f32 %v523, 1.442695
    %v550 = vpow.pop %v549
    %v551 = vmul.f32 %v524, 1.442695
    %v552 = vpow.pop %v551
    %v553 = vmul.f32 %v525, 1.442695
    %v554 = vpow.pop %v553
    %v555 = vmul.f32 %v526, 1.442695
    %v556 = vpow.pop %v555
    %v557 = vmul.f32 %v527, 1.442695
    %v558 = vpow.pop %v557
    %v559 = vmul.f32 %v528, 1.442695
    %v560 = vpow.pop %v559
    %v561 = vadd.f32 %v530, 1.0
    %v562 = vadd.f32 %v532, 1.0
    %v563 = vadd.f32 %v534, 1.0
    %v564 = vadd.f32 %v536, 1.0
    %v565 = vadd.f32 %v538, 1.0
    %v566 = vadd.f32 %v540, 1.0
    %v567 = vadd.f32 %v542, 1.0
    %v568 = vadd.f32 %v544, 1.0
    %v569 = vadd.f32 %v546, 1.0
    %v570 = vadd.f32 %v548, 1.0
    %v571 = vadd.f32 %v550, 1.0
    %v572 = vadd.f32 %v552, 1.0
    %v573 = vadd.f32 %v554, 1.0
    %v574 = vadd.f32 %v556, 1.0
    %v575 = vadd.f32 %v558, 1.0
    %v576 = vadd.f32 %v560, 1.0
    %v577 = vrcp.pop %v561
    %v578 = vmul.f32 1.0, %v577
    %v579 = vrcp.pop %v562
    %v580 = vmul.f32 1.0, %v579
    %v581 = vrcp.pop %v563
    %v582 = vmul.f32 1.0, %v581
    %v583 = vrcp.pop %v564
    %v584 = vmul.f32 1.0, %v583
    %v585 = vrcp.pop %v565
    %v586 = vmul.f32 1.0, %v585
    %v587 = vrcp.pop %v566
    %v588 = vmul.f32 1.0, %v587
    %v589 = vrcp.pop %v567
    %v590 = vmul.f32 1.0, %v589
    %v591 = vrcp.pop %v568
    %v592 = vmul.f32 1.0, %v591
    %v593 = vrcp.pop %v569
    %v594 = vmul.f32 1.0, %v593
    %v595 = vrcp.pop %v570
    %v596 = vmul.f32 1.0, %v595
    %v597 = vrcp.pop %v571
    %v598 = vmul.f32 1.0, %v597
    %v599 = vrcp.pop %v572
    %v600 = vmul.f32 1.0, %v599
    %v601 = vrcp.pop %v573
    %v602 = vmul.f32 1.0, %v601
    %v603 = vrcp.pop %v574
    %v604 = vmul.f32 1.0, %v603
    %v605 = vrcp.pop %v575
    %v606 = vmul.f32 1.0, %v605
    %v607 = vrcp.pop %v576
    %v608 = vmul.f32 1.0, %v607
    %625 = vrot.lane.b32.xlu0 %v497, 32
    %v626 = vpop.permute.xlu0 %625
    %627 = vrot.lane.b32.xlu0 %v498, 32
    %v628 = vpop.permute.xlu0 %627
    %629 = vrot.lane.b32.xlu0 %v499, 32
    %v630 = vpop.permute.xlu0 %629
    %631 = vrot.lane.b32.xlu0 %v500, 32
    %v632 = vpop.permute.xlu0 %631
    %633 = vrot.lane.b32.xlu0 %v501, 32
    %v634 = vpop.permute.xlu0 %633
    %635 = vrot.lane.b32.xlu0 %v502, 32
    %v636 = vpop.permute.xlu0 %635
    %637 = vrot.lane.b32.xlu0 %v503, 32
    %v638 = vpop.permute.xlu0 %637
    %639 = vrot.lane.b32.xlu0 %v504, 32
    %v640 = vpop.permute.xlu0 %639
    %641 = vrot.lane.b32.xlu0 %v505, 32
    %v642 = vpop.permute.xlu0 %641
    %643 = vrot.lane.b32.xlu0 %v506, 32
    %v644 = vpop.permute.xlu0 %643
    %645 = vrot.lane.b32.xlu0 %v507, 32
    %v646 = vpop.permute.xlu0 %645
    %647 = vrot.lane.b32.xlu0 %v508, 32
    %v648 = vpop.permute.xlu0 %647
    %649 = vrot.lane.b32.xlu0 %v509, 32
    %v650 = vpop.permute.xlu0 %649
    %651 = vrot.lane.b32.xlu0 %v510, 32
    %v652 = vpop.permute.xlu0 %651
    %653 = vrot.lane.b32.xlu0 %v511, 32
    %v654 = vpop.permute.xlu0 %653
    %655 = vrot.lane.b32.xlu0 %v512, 32
    %v656 = vpop.permute.xlu0 %655
    %v673 = vmul.f32 %v578, %v626
    %v674 = vmul.f32 %v580, %v628
    %v675 = vmul.f32 %v582, %v630
    %v676 = vmul.f32 %v584, %v632
    %v677 = vmul.f32 %v586, %v634
    %v678 = vmul.f32 %v588, %v636
    %v679 = vmul.f32 %v590, %v638
    %v680 = vmul.f32 %v592, %v640
    %v681 = vmul.f32 %v594, %v642
    %v682 = vmul.f32 %v596, %v644
    %v683 = vmul.f32 %v598, %v646
    %v684 = vmul.f32 %v600, %v648
    %v685 = vmul.f32 %v602, %v650
    %v686 = vmul.f32 %v604, %v652
    %v687 = vmul.f32 %v606, %v654
    %v688 = vmul.f32 %v608, %v656
    %705 = vrot.lane.b32.xlu0 %v673, 64
    %v706 = vpop.permute.xlu0 %705
    %707 = vrot.lane.b32.xlu0 %v674, 64
    %v708 = vpop.permute.xlu0 %707
    %709 = vrot.lane.b32.xlu0 %v675, 64
    %v710 = vpop.permute.xlu0 %709
    %711 = vrot.lane.b32.xlu0 %v676, 64
    %v712 = vpop.permute.xlu0 %711
    %713 = vrot.lane.b32.xlu0 %v677, 64
    %v714 = vpop.permute.xlu0 %713
    %715 = vrot.lane.b32.xlu0 %v678, 64
    %v716 = vpop.permute.xlu0 %715
    %717 = vrot.lane.b32.xlu0 %v679, 64
    %v718 = vpop.permute.xlu0 %717
    %719 = vrot.lane.b32.xlu0 %v680, 64
    %v720 = vpop.permute.xlu0 %719
    %721 = vrot.lane.b32.xlu0 %v681, 64
    %v722 = vpop.permute.xlu0 %721
    %723 = vrot.lane.b32.xlu0 %v682, 64
    %v724 = vpop.permute.xlu0 %723
    %725 = vrot.lane.b32.xlu0 %v683, 64
    %v726 = vpop.permute.xlu0 %725
    %727 = vrot.lane.b32.xlu0 %v684, 64
    %v728 = vpop.permute.xlu0 %727
    %729 = vrot.lane.b32.xlu0 %v685, 64
    %v730 = vpop.permute.xlu0 %729
    %731 = vrot.lane.b32.xlu0 %v686, 64
    %v732 = vpop.permute.xlu0 %731
    %733 = vrot.lane.b32.xlu0 %v687, 64
    %v734 = vpop.permute.xlu0 %733
    %735 = vrot.lane.b32.xlu0 %v688, 64
    %v736 = vpop.permute.xlu0 %735
    %v753 = vadd.f32 %v497, %v706
    %v754 = vadd.f32 %v498, %v708
    %v755 = vadd.f32 %v499, %v710
    %v756 = vadd.f32 %v500, %v712
    %v757 = vadd.f32 %v501, %v714
    %v758 = vadd.f32 %v502, %v716
    %v759 = vadd.f32 %v503, %v718
    %v760 = vadd.f32 %v504, %v720
    %v761 = vadd.f32 %v505, %v722
    %v762 = vadd.f32 %v506, %v724
    %v763 = vadd.f32 %v507, %v726
    %v764 = vadd.f32 %v508, %v728
    %v765 = vadd.f32 %v509, %v730
    %v766 = vadd.f32 %v510, %v732
    %v767 = vadd.f32 %v511, %v734
    %v768 = vadd.f32 %v512, %v736
    %v769 = vtanh.pop %v753
    %v770 = vtanh.pop %v754
    %v771 = vtanh.pop %v755
    %v772 = vtanh.pop %v756
    %v773 = vtanh.pop %v757
    %v774 = vtanh.pop %v758
    %v775 = vtanh.pop %v759
    %v776 = vtanh.pop %v760
    %v777 = vtanh.pop %v761
    %v778 = vtanh.pop %v762
    %v779 = vtanh.pop %v763
    %v780 = vtanh.pop %v764
    %v781 = vtanh.pop %v765
    %v782 = vtanh.pop %v766
    %v783 = vtanh.pop %v767
    %v784 = vtanh.pop %v768
    %v785 = vsub.f32 1.0, %v578
    %v786 = vsub.f32 1.0, %v580
    %v787 = vsub.f32 1.0, %v582
    %v788 = vsub.f32 1.0, %v584
    %v789 = vsub.f32 1.0, %v586
    %v790 = vsub.f32 1.0, %v588
    %v791 = vsub.f32 1.0, %v590
    %v792 = vsub.f32 1.0, %v592
    %v793 = vsub.f32 1.0, %v594
    %v794 = vsub.f32 1.0, %v596
    %v795 = vsub.f32 1.0, %v598
    %v796 = vsub.f32 1.0, %v600
    %v797 = vsub.f32 1.0, %v602
    %v798 = vsub.f32 1.0, %v604
    %v799 = vsub.f32 1.0, %v606
    %v800 = vsub.f32 1.0, %v608
    %817 = vrot.lane.b32.xlu0 %v769, 96
    %v818 = vpop.permute.xlu0 %817
    %819 = vrot.lane.b32.xlu0 %v770, 96
    %v820 = vpop.permute.xlu0 %819
    %821 = vrot.lane.b32.xlu0 %v771, 96
    %v822 = vpop.permute.xlu0 %821
    %823 = vrot.lane.b32.xlu0 %v772, 96
    %v824 = vpop.permute.xlu0 %823
    %825 = vrot.lane.b32.xlu0 %v773, 96
    %v826 = vpop.permute.xlu0 %825
    %827 = vrot.lane.b32.xlu0 %v774, 96
    %v828 = vpop.permute.xlu0 %827
    %829 = vrot.lane.b32.xlu0 %v775, 96
    %v830 = vpop.permute.xlu0 %829
    %831 = vrot.lane.b32.xlu0 %v776, 96
    %v832 = vpop.permute.xlu0 %831
    %833 = vrot.lane.b32.xlu0 %v777, 96
    %v834 = vpop.permute.xlu0 %833
    %835 = vrot.lane.b32.xlu0 %v778, 96
    %v836 = vpop.permute.xlu0 %835
    %837 = vrot.lane.b32.xlu0 %v779, 96
    %v838 = vpop.permute.xlu0 %837
    %839 = vrot.lane.b32.xlu0 %v780, 96
    %v840 = vpop.permute.xlu0 %839
    %841 = vrot.lane.b32.xlu0 %v781, 96
    %v842 = vpop.permute.xlu0 %841
    %843 = vrot.lane.b32.xlu0 %v782, 96
    %v844 = vpop.permute.xlu0 %843
    %845 = vrot.lane.b32.xlu0 %v783, 96
    %v846 = vpop.permute.xlu0 %845
    %847 = vrot.lane.b32.xlu0 %v784, 96
    %v848 = vpop.permute.xlu0 %847
    %v865 = vmul.f32 %v785, %v818
    %v866 = vmul.f32 %v786, %v820
    %v867 = vmul.f32 %v787, %v822
    %v868 = vmul.f32 %v788, %v824
    %v869 = vmul.f32 %v789, %v826
    %v870 = vmul.f32 %v790, %v828
    %v871 = vmul.f32 %v791, %v830
    %v872 = vmul.f32 %v792, %v832
    %v873 = vmul.f32 %v793, %v834
    %v874 = vmul.f32 %v794, %v836
    %v875 = vmul.f32 %v795, %v838
    %v876 = vmul.f32 %v796, %v840
    %v877 = vmul.f32 %v797, %v842
    %v878 = vmul.f32 %v798, %v844
    %v879 = vmul.f32 %v799, %v846
    %v880 = vmul.f32 %v800, %v848
    %897 = vrot.lane.b32.xlu0 %v22, 32
    %v898 = vpop.permute.xlu0 %897
    %899 = vrot.lane.b32.xlu0 %v23, 32
    %v900 = vpop.permute.xlu0 %899
    %901 = vrot.lane.b32.xlu0 %v24, 32
    %v902 = vpop.permute.xlu0 %901
    %903 = vrot.lane.b32.xlu0 %v25, 32
    %v904 = vpop.permute.xlu0 %903
    %905 = vrot.lane.b32.xlu0 %v26, 32
    %v906 = vpop.permute.xlu0 %905
    %907 = vrot.lane.b32.xlu0 %v27, 32
    %v908 = vpop.permute.xlu0 %907
    %909 = vrot.lane.b32.xlu0 %v28, 32
    %v910 = vpop.permute.xlu0 %909
    %911 = vrot.lane.b32.xlu0 %v29, 32
    %v912 = vpop.permute.xlu0 %911
    %913 = vrot.lane.b32.xlu0 %v30, 32
    %v914 = vpop.permute.xlu0 %913
    %915 = vrot.lane.b32.xlu0 %v31, 32
    %v916 = vpop.permute.xlu0 %915
    %917 = vrot.lane.b32.xlu0 %v32, 32
    %v918 = vpop.permute.xlu0 %917
    %919 = vrot.lane.b32.xlu0 %v33, 32
    %v920 = vpop.permute.xlu0 %919
    %921 = vrot.lane.b32.xlu0 %v34, 32
    %v922 = vpop.permute.xlu0 %921
    %923 = vrot.lane.b32.xlu0 %v35, 32
    %v924 = vpop.permute.xlu0 %923
    %925 = vrot.lane.b32.xlu0 %v36, 32
    %v926 = vpop.permute.xlu0 %925
    %927 = vrot.lane.b32.xlu0 %v37, 32
    %v928 = vpop.permute.xlu0 %927
    %v945 = vmul.f32 %v578, %v898
    %v946 = vmul.f32 %v580, %v900
    %v947 = vmul.f32 %v582, %v902
    %v948 = vmul.f32 %v584, %v904
    %v949 = vmul.f32 %v586, %v906
    %v950 = vmul.f32 %v588, %v908
    %v951 = vmul.f32 %v590, %v910
    %v952 = vmul.f32 %v592, %v912
    %v953 = vmul.f32 %v594, %v914
    %v954 = vmul.f32 %v596, %v916
    %v955 = vmul.f32 %v598, %v918
    %v956 = vmul.f32 %v600, %v920
    %v957 = vmul.f32 %v602, %v922
    %v958 = vmul.f32 %v604, %v924
    %v959 = vmul.f32 %v606, %v926
    %v960 = vmul.f32 %v608, %v928
    %v961 = vadd.f32 %v865, %v945
    %v962 = vadd.f32 %v866, %v946
    %v963 = vadd.f32 %v867, %v947
    %v964 = vadd.f32 %v868, %v948
    %v965 = vadd.f32 %v869, %v949
    %v966 = vadd.f32 %v870, %v950
    %v967 = vadd.f32 %v871, %v951
    %v968 = vadd.f32 %v872, %v952
    %v969 = vadd.f32 %v873, %v953
    %v970 = vadd.f32 %v874, %v954
    %v971 = vadd.f32 %v875, %v955
    %v972 = vadd.f32 %v876, %v956
    %v973 = vadd.f32 %v877, %v957
    %v974 = vadd.f32 %v878, %v958
    %v975 = vadd.f32 %v879, %v959
    %v976 = vadd.f32 %v880, %v960
    %v977 = vpack.c.bf16 %v962, %v961
    %v978 = vpack.c.bf16 %v964, %v963
    %v979 = vpack.c.bf16 %v966, %v965
    %v980 = vpack.c.bf16 %v968, %v967
    %v981 = vpack.c.bf16 %v970, %v969
    %v982 = vpack.c.bf16 %v972, %v971
    %v983 = vpack.c.bf16 %v974, %v973
    %v984 = vpack.c.bf16 %v976, %v975
    %993 = vrot.lane.b32.xlu0 %v977, 96
    %v994 = vpop.permute.xlu0 %993
    %995 = vrot.lane.b32.xlu0 %v978, 96
    %v996 = vpop.permute.xlu0 %995
    %997 = vrot.lane.b32.xlu0 %v979, 96
    %v998 = vpop.permute.xlu0 %997
    %999 = vrot.lane.b32.xlu0 %v980, 96
    %v1000 = vpop.permute.xlu0 %999
    %1001 = vrot.lane.b32.xlu0 %v981, 96
    %v1002 = vpop.permute.xlu0 %1001
    %1003 = vrot.lane.b32.xlu0 %v982, 96
    %v1004 = vpop.permute.xlu0 %1003
    %1005 = vrot.lane.b32.xlu0 %v983, 96
    %v1006 = vpop.permute.xlu0 %1005
    %1007 = vrot.lane.b32.xlu0 %v984, 96
    %v1008 = vpop.permute.xlu0 %1007
    %1017 = vmatprep.subr.bf16.mxu0 0
    %1018 = vmatpush1.bf16.msra.mxu0 %v994
    %1019 = vmatprep.subr.bf16.mxu0 0
    %1020 = vmatpush1.bf16.msra.mxu0 %v996
    %1021 = vmatprep.subr.bf16.mxu0 0
    %1022 = vmatpush1.bf16.msra.mxu0 %v998
    %1023 = vmatprep.subr.bf16.mxu0 0
    %1024 = vmatpush1.bf16.msra.mxu0 %v1000
    %1025 = vmatprep.subr.bf16.mxu0 0
    %1026 = vmatpush1.bf16.msra.mxu0 %v1002
    %1027 = vmatprep.subr.bf16.mxu0 0
    %1028 = vmatpush1.bf16.msra.mxu0 %v1004
    %1029 = vmatprep.subr.bf16.mxu0 0
    %1030 = vmatpush1.bf16.msra.mxu0 %v1006
    %1031 = vmatprep.subr.bf16.mxu0 0
    %1032 = vmatpush1.bf16.msra.mxu0 %v1008
    %1033 = vmatprep.subr.bf16.mxu0 0
    %1034 = vmatpush1.bf16.msra.mxu0 0
    %1035 = vmatprep.subr.bf16.mxu0 0
    %1036 = vmatpush1.bf16.msra.mxu0 0
    %1037 = vmatprep.subr.bf16.mxu0 0
    %1038 = vmatpush1.bf16.msra.mxu0 0
    %1039 = vmatprep.subr.bf16.mxu0 0
    %1040 = vmatpush1.bf16.msra.mxu0 0
    %1041 = vmatprep.subr.bf16.mxu0 0
    %1042 = vmatpush1.bf16.msra.mxu0 0
    %1043 = vmatprep.subr.bf16.mxu0 0
    %1044 = vmatpush1.bf16.msra.mxu0 0
    %1045 = vmatprep.subr.bf16.mxu0 0
    %1046 = vmatpush1.bf16.msra.mxu0 0
    %1047 = vmatprep.subr.bf16.mxu0 0
    %1048 = vmatpush1.bf16.msra.mxu0 0
    %1049 = vmatprep.mubr.bf16.mxu0 0
    %1050 = vmatmul.mubr.bf16.gmra.mrb[0].mxu0 %v99
    %v1051 = vpop.f32.mrb[0].mxu0
    %v1052 = vadd.f32 0.0, %v1051
    %v1053 = vpop.f32.mrb[0].mxu0
    %v1054 = vpop.f32.mrb[0].mxu0
    %v1055 = vadd.f32 0.0, %v1054
    %v1056 = vpop.f32.mrb[0].mxu0
    %1057 = vmatprep.mubr.bf16.mxu0 0
    %1058 = vmatmul.mubr.bf16.gmra.mrb[0].mxu0 %v100
    %v1059 = vpop.f32.mrb[0].mxu0
    %v1060 = vadd.f32 0.0, %v1059
    %v1061 = vpop.f32.mrb[0].mxu0
    %v1062 = vpop.f32.mrb[0].mxu0
    %v1063 = vadd.f32 0.0, %v1062
    %v1064 = vpop.f32.mrb[0].mxu0
    %1065 = vmatprep.mubr.bf16.mxu0 0
    %1066 = vmatmul.mubr.bf16.gmra.mrb[0].mxu0 %v101
    %v1067 = vpop.f32.mrb[0].mxu0
    %v1068 = vadd.f32 0.0, %v1067
    %v1069 = vpop.f32.mrb[0].mxu0
    %v1070 = vpop.f32.mrb[0].mxu0
    %v1071 = vadd.f32 0.0, %v1070
    %v1072 = vpop.f32.mrb[0].mxu0
    %1073 = vmatprep.mubr.bf16.mxu0 0
    %1074 = vmatmul.mubr.bf16.gmra.mrb[0].mxu0 %v102
    %v1075 = vpop.f32.mrb[0].mxu0
    %v1076 = vadd.f32 0.0, %v1075
    %v1077 = vpop.f32.mrb[0].mxu0
    %v1078 = vpop.f32.mrb[0].mxu0
    %v1079 = vadd.f32 0.0, %v1078
    %v1080 = vpop.f32.mrb[0].mxu0
    %1081 = vmatprep.mubr.bf16.mxu0 0
    %1082 = vmatmul.mubr.bf16.gmra.mrb[0].mxu0 %v103
    %v1083 = vpop.f32.mrb[0].mxu0
    %v1084 = vadd.f32 0.0, %v1083
    %v1085 = vpop.f32.mrb[0].mxu0
    %v1086 = vpop.f32.mrb[0].mxu0
    %v1087 = vadd.f32 0.0, %v1086
    %v1088 = vpop.f32.mrb[0].mxu0
    %1089 = vmatprep.mubr.bf16.mxu0 0
    %1090 = vmatmul.mubr.bf16.gmra.mrb[0].mxu0 %v104
    %v1091 = vpop.f32.mrb[0].mxu0
    %v1092 = vadd.f32 0.0, %v1091
    %v1093 = vpop.f32.mrb[0].mxu0
    %v1094 = vpop.f32.mrb[0].mxu0
    %v1095 = vadd.f32 0.0, %v1094
    %v1096 = vpop.f32.mrb[0].mxu0
    %1097 = vmatprep.mubr.bf16.mxu0 0
    %1098 = vmatmul.mubr.bf16.gmra.mrb[0].mxu0 %v105
    %v1099 = vpop.f32.mrb[0].mxu0
    %v1100 = vadd.f32 0.0, %v1099
    %v1101 = vpop.f32.mrb[0].mxu0
    %v1102 = vpop.f32.mrb[0].mxu0
    %v1103 = vadd.f32 0.0, %v1102
    %v1104 = vpop.f32.mrb[0].mxu0
    %1105 = vmatprep.mubr.bf16.mxu0 0
    %1106 = vmatmul.mubr.bf16.gmra.mrb[0].mxu0 %v106
    %v1107 = vpop.f32.mrb[0].mxu0
    %v1108 = vadd.f32 0.0, %v1107
    %v1109 = vpop.f32.mrb[0].mxu0
    %v1110 = vpop.f32.mrb[0].mxu0
    %v1111 = vadd.f32 0.0, %v1110
    %v1112 = vpop.f32.mrb[0].mxu0
    %1113 = vdwg.mxu0
    %v1114 = vpack.c.bf16 %v1055, %v1052
    %v1115 = vpack.c.bf16 %v1063, %v1060
    %v1116 = vpack.c.bf16 %v1071, %v1068
    %v1117 = vpack.c.bf16 %v1079, %v1076
    %v1118 = vpack.c.bf16 %v1087, %v1084
    %v1119 = vpack.c.bf16 %v1095, %v1092
    %v1120 = vpack.c.bf16 %v1103, %v1100
    %v1121 = vpack.c.bf16 %v1111, %v1108
    %s1122 = scalar_lea.vmem %s2, 16
    %v1123 = vld [vmem:[%s1122] sm:$0xf]
    %v1124 = vld [vmem:[%s1122 + $0x4] sm:$0xf]
    %v1125 = vld [vmem:[%s1122 + $0x8] sm:$0xf]
    %v1126 = vld [vmem:[%s1122 + $0xc] sm:$0xf]
    %v1131 = vunpack.c.l.b16 %v1123
    %v1132 = vunpack.c.l.b16 %v1124
    %v1133 = vunpack.c.l.b16 %v1125
    %v1134 = vunpack.c.l.b16 %v1126
    %v1135 = vpack.c.b16 %v1132, %v1131
    %v1136 = vpack.c.b16 %v1134, %v1133
    %v1140 = vsel %vm236, %v1114, 0
    %v1143 = vsel %vm236, %v1115, 0
    %v1146 = vsel %vm236, %v1116, 0
    %v1149 = vsel %vm236, %v1117, 0
    %v1152 = vsel %vm236, %v1118, 0
    %v1155 = vsel %vm236, %v1119, 0
    %v1158 = vsel %vm236, %v1120, 0
    %v1161 = vsel %vm236, %v1121, 0
    %1163 = vmatprep.subr.bf16.mxu0 0
    %1164 = vmatpush1.bf16.msra.mxu0 %v1135
    %1165 = vmatprep.subr.bf16.mxu0 0
    %1166 = vmatpush1.bf16.msra.mxu0 %v1136
    %1167 = vmatprep.subr.bf16.mxu0 0
    %1168 = vmatpush1.bf16.msra.mxu0 0
    %1169 = vmatprep.subr.bf16.mxu0 0
    %1170 = vmatpush1.bf16.msra.mxu0 0
    %1171 = vmatprep.subr.bf16.mxu0 0
    %1172 = vmatpush1.bf16.msra.mxu0 0
    %1173 = vmatprep.subr.bf16.mxu0 0
    %1174 = vmatpush1.bf16.msra.mxu0 0
    %1175 = vmatprep.subr.bf16.mxu0 0
    %1176 = vmatpush1.bf16.msra.mxu0 0
    %1177 = vmatprep.subr.bf16.mxu0 0
    %1178 = vmatpush1.bf16.msra.mxu0 0
    %1179 = vmatprep.subr.bf16.mxu0 0
    %1180 = vmatpush1.bf16.msra.mxu0 0
    %1181 = vmatprep.subr.bf16.mxu0 0
    %1182 = vmatpush1.bf16.msra.mxu0 0
    %1183 = vmatprep.subr.bf16.mxu0 0
    %1184 = vmatpush1.bf16.msra.mxu0 0
    %1185 = vmatprep.subr.bf16.mxu0 0
    %1186 = vmatpush1.bf16.msra.mxu0 0
    %1187 = vmatprep.subr.bf16.mxu0 0
    %1188 = vmatpush1.bf16.msra.mxu0 0
    %1189 = vmatprep.subr.bf16.mxu0 0
    %1190 = vmatpush1.bf16.msra.mxu0 0
    %1191 = vmatprep.subr.bf16.mxu0 0
    %1192 = vmatpush1.bf16.msra.mxu0 0
    %1193 = vmatprep.subr.bf16.mxu0 0
    %1194 = vmatpush1.bf16.msra.mxu0 0
    %1195 = vmatprep.mubr.bf16.mxu0 0
    %1196 = vmatmul.mubr.bf16.gmra.mrb[0].mxu0 %v1140
    %v1197 = vpop.f32.mrb[0].mxu0
    %v1198 = vadd.f32 0.0, %v1197
    %v1199 = vpop.f32.mrb[0].mxu0
    %v1200 = vpop.f32.mrb[0].mxu0
    %v1201 = vadd.f32 0.0, %v1200
    %v1202 = vpop.f32.mrb[0].mxu0
    %1203 = vmatprep.mubr.bf16.mxu0 0
    %1204 = vmatmul.mubr.bf16.gmra.mrb[0].mxu0 %v1143
    %v1205 = vpop.f32.mrb[0].mxu0
    %v1206 = vadd.f32 0.0, %v1205
    %v1207 = vpop.f32.mrb[0].mxu0
    %v1208 = vpop.f32.mrb[0].mxu0
    %v1209 = vadd.f32 0.0, %v1208
    %v1210 = vpop.f32.mrb[0].mxu0
    %1211 = vmatprep.mubr.bf16.mxu0 0
    %1212 = vmatmul.mubr.bf16.gmra.mrb[0].mxu0 %v1146
    %v1213 = vpop.f32.mrb[0].mxu0
    %v1214 = vadd.f32 0.0, %v1213
    %v1215 = vpop.f32.mrb[0].mxu0
    %v1216 = vpop.f32.mrb[0].mxu0
    %v1217 = vadd.f32 0.0, %v1216
    %v1218 = vpop.f32.mrb[0].mxu0
    %1219 = vmatprep.mubr.bf16.mxu0 0
    %1220 = vmatmul.mubr.bf16.gmra.mrb[0].mxu0 %v1149
    %v1221 = vpop.f32.mrb[0].mxu0
    %v1222 = vadd.f32 0.0, %v1221
    %v1223 = vpop.f32.mrb[0].mxu0
    %v1224 = vpop.f32.mrb[0].mxu0
    %v1225 = vadd.f32 0.0, %v1224
    %v1226 = vpop.f32.mrb[0].mxu0
    %1227 = vmatprep.mubr.bf16.mxu0 0
    %1228 = vmatmul.mubr.bf16.gmra.mrb[0].mxu0 %v1152
    %v1229 = vpop.f32.mrb[0].mxu0
    %v1230 = vadd.f32 0.0, %v1229
    %v1231 = vpop.f32.mrb[0].mxu0
    %v1232 = vpop.f32.mrb[0].mxu0
    %v1233 = vadd.f32 0.0, %v1232
    %v1234 = vpop.f32.mrb[0].mxu0
    %1235 = vmatprep.mubr.bf16.mxu0 0
    %1236 = vmatmul.mubr.bf16.gmra.mrb[0].mxu0 %v1155
    %v1237 = vpop.f32.mrb[0].mxu0
    %v1238 = vadd.f32 0.0, %v1237
    %v1239 = vpop.f32.mrb[0].mxu0
    %v1240 = vpop.f32.mrb[0].mxu0
    %v1241 = vadd.f32 0.0, %v1240
    %v1242 = vpop.f32.mrb[0].mxu0
    %1243 = vmatprep.mubr.bf16.mxu0 0
    %1244 = vmatmul.mubr.bf16.gmra.mrb[0].mxu0 %v1158
    %v1245 = vpop.f32.mrb[0].mxu0
    %v1246 = vadd.f32 0.0, %v1245
    %v1247 = vpop.f32.mrb[0].mxu0
    %v1248 = vpop.f32.mrb[0].mxu0
    %v1249 = vadd.f32 0.0, %v1248
    %v1250 = vpop.f32.mrb[0].mxu0
    %1251 = vmatprep.mubr.bf16.mxu0 0
    %1252 = vmatmul.mubr.bf16.gmra.mrb[0].mxu0 %v1161
    %v1253 = vpop.f32.mrb[0].mxu0
    %v1254 = vadd.f32 0.0, %v1253
    %v1255 = vpop.f32.mrb[0].mxu0
    %v1256 = vpop.f32.mrb[0].mxu0
    %v1257 = vadd.f32 0.0, %v1256
    %v1258 = vpop.f32.mrb[0].mxu0
    %1259 = vdwg.mxu0
    %v1261 = vsel %vm236, %v994, 0
    %v1264 = vsel %vm236, %v996, 0
    %v1267 = vsel %vm236, %v998, 0
    %v1270 = vsel %vm236, %v1000, 0
    %v1273 = vsel %vm236, %v1002, 0
    %v1276 = vsel %vm236, %v1004, 0
    %v1279 = vsel %vm236, %v1006, 0
    %v1282 = vsel %vm236, %v1008, 0
    %1284 = vmatprep.subr.bf16.mxu0 0
    %1285 = vmatpush1.bf16.msra.mxu0 %v366
    %1286 = vmatprep.subr.bf16.mxu0 0
    %1287 = vmatpush1.bf16.msra.mxu0 %v367
    %1288 = vmatprep.subr.bf16.mxu0 0
    %1289 = vmatpush1.bf16.msra.mxu0 0
    %1290 = vmatprep.subr.bf16.mxu0 0
    %1291 = vmatpush1.bf16.msra.mxu0 0
    %1292 = vmatprep.subr.bf16.mxu0 0
    %1293 = vmatpush1.bf16.msra.mxu0 0
    %1294 = vmatprep.subr.bf16.mxu0 0
    %1295 = vmatpush1.bf16.msra.mxu0 0
    %1296 = vmatprep.subr.bf16.mxu0 0
    %1297 = vmatpush1.bf16.msra.mxu0 0
    %1298 = vmatprep.subr.bf16.mxu0 0
    %1299 = vmatpush1.bf16.msra.mxu0 0
    %1300 = vmatprep.subr.bf16.mxu0 0
    %1301 = vmatpush1.bf16.msra.mxu0 0
    %1302 = vmatprep.subr.bf16.mxu0 0
    %1303 = vmatpush1.bf16.msra.mxu0 0
    %1304 = vmatprep.subr.bf16.mxu0 0
    %1305 = vmatpush1.bf16.msra.mxu0 0
    %1306 = vmatprep.subr.bf16.mxu0 0
    %1307 = vmatpush1.bf16.msra.mxu0 0
    %1308 = vmatprep.subr.bf16.mxu0 0
    %1309 = vmatpush1.bf16.msra.mxu0 0
    %1310 = vmatprep.subr.bf16.mxu0 0
    %1311 = vmatpush1.bf16.msra.mxu0 0
    %1312 = vmatprep.subr.bf16.mxu0 0
    %1313 = vmatpush1.bf16.msra.mxu0 0
    %1314 = vmatprep.subr.bf16.mxu0 0
    %1315 = vmatpush1.bf16.msra.mxu0 0
    %1316 = vmatprep.mubr.bf16.mxu0 0
    %1317 = vmatmul.mubr.bf16.gmra.mrb[0].mxu0 %v1261
    %v1318 = vpop.f32.mrb[0].mxu0
    %v1319 = vadd.f32 %v1198, %v1318
    %v1320 = vpop.f32.mrb[0].mxu0
    %v1321 = vpop.f32.mrb[0].mxu0
    %v1322 = vadd.f32 %v1201, %v1321
    %v1323 = vpop.f32.mrb[0].mxu0
    %1324 = vmatprep.mubr.bf16.mxu0 0
    %1325 = vmatmul.mubr.bf16.gmra.mrb[0].mxu0 %v1264
    %v1326 = vpop.f32.mrb[0].mxu0
    %v1327 = vadd.f32 %v1206, %v1326
    %v1328 = vpop.f32.mrb[0].mxu0
    %v1329 = vpop.f32.mrb[0].mxu0
    %v1330 = vadd.f32 %v1209, %v1329
    %v1331 = vpop.f32.mrb[0].mxu0
    %1332 = vmatprep.mubr.bf16.mxu0 0
    %1333 = vmatmul.mubr.bf16.gmra.mrb[0].mxu0 %v1267
    %v1334 = vpop.f32.mrb[0].mxu0
    %v1335 = vadd.f32 %v1214, %v1334
    %v1336 = vpop.f32.mrb[0].mxu0
    %v1337 = vpop.f32.mrb[0].mxu0
    %v1338 = vadd.f32 %v1217, %v1337
    %v1339 = vpop.f32.mrb[0].mxu0
    %1340 = vmatprep.mubr.bf16.mxu0 0
    %1341 = vmatmul.mubr.bf16.gmra.mrb[0].mxu0 %v1270
    %v1342 = vpop.f32.mrb[0].mxu0
    %v1343 = vadd.f32 %v1222, %v1342
    %v1344 = vpop.f32.mrb[0].mxu0
    %v1345 = vpop.f32.mrb[0].mxu0
    %v1346 = vadd.f32 %v1225, %v1345
    %v1347 = vpop.f32.mrb[0].mxu0
    %1348 = vmatprep.mubr.bf16.mxu0 0
    %1349 = vmatmul.mubr.bf16.gmra.mrb[0].mxu0 %v1273
    %v1350 = vpop.f32.mrb[0].mxu0
    %v1351 = vadd.f32 %v1230, %v1350
    %v1352 = vpop.f32.mrb[0].mxu0
    %v1353 = vpop.f32.mrb[0].mxu0
    %v1354 = vadd.f32 %v1233, %v1353
    %v1355 = vpop.f32.mrb[0].mxu0
    %1356 = vmatprep.mubr.bf16.mxu0 0
    %1357 = vmatmul.mubr.bf16.gmra.mrb[0].mxu0 %v1276
    %v1358 = vpop.f32.mrb[0].mxu0
    %v1359 = vadd.f32 %v1238, %v1358
    %v1360 = vpop.f32.mrb[0].mxu0
    %v1361 = vpop.f32.mrb[0].mxu0
    %v1362 = vadd.f32 %v1241, %v1361
    %v1363 = vpop.f32.mrb[0].mxu0
    %1364 = vmatprep.mubr.bf16.mxu0 0
    %1365 = vmatmul.mubr.bf16.gmra.mrb[0].mxu0 %v1279
    %v1366 = vpop.f32.mrb[0].mxu0
    %v1367 = vadd.f32 %v1246, %v1366
    %v1368 = vpop.f32.mrb[0].mxu0
    %v1369 = vpop.f32.mrb[0].mxu0
    %v1370 = vadd.f32 %v1249, %v1369
    %v1371 = vpop.f32.mrb[0].mxu0
    %1372 = vmatprep.mubr.bf16.mxu0 0
    %1373 = vmatmul.mubr.bf16.gmra.mrb[0].mxu0 %v1282
    %v1374 = vpop.f32.mrb[0].mxu0
    %v1375 = vadd.f32 %v1254, %v1374
    %v1376 = vpop.f32.mrb[0].mxu0
    %v1377 = vpop.f32.mrb[0].mxu0
    %v1378 = vadd.f32 %v1257, %v1377
    %v1379 = vpop.f32.mrb[0].mxu0
    %1380 = vdwg.mxu0
    %v1381 = vadd.f32 %v1319, %v495
    %v1382 = vadd.f32 %v1322, %v495
    %v1383 = vadd.f32 %v1327, %v495
    %v1384 = vadd.f32 %v1330, %v495
    %v1385 = vadd.f32 %v1335, %v495
    %v1386 = vadd.f32 %v1338, %v495
    %v1387 = vadd.f32 %v1343, %v495
    %v1388 = vadd.f32 %v1346, %v495
    %v1389 = vadd.f32 %v1351, %v495
    %v1390 = vadd.f32 %v1354, %v495
    %v1391 = vadd.f32 %v1359, %v495
    %v1392 = vadd.f32 %v1362, %v495
    %v1393 = vadd.f32 %v1367, %v495
    %v1394 = vadd.f32 %v1370, %v495
    %v1395 = vadd.f32 %v1375, %v495
    %v1396 = vadd.f32 %v1378, %v495
    %v1397 = vxor.u32 %v1381, 2147483648
    %v1398 = vxor.u32 %v1382, 2147483648
    %v1399 = vxor.u32 %v1383, 2147483648
    %v1400 = vxor.u32 %v1384, 2147483648
    %v1401 = vxor.u32 %v1385, 2147483648
    %v1402 = vxor.u32 %v1386, 2147483648
    %v1403 = vxor.u32 %v1387, 2147483648
    %v1404 = vxor.u32 %v1388, 2147483648
    %v1405 = vxor.u32 %v1389, 2147483648
    %v1406 = vxor.u32 %v1390, 2147483648
    %v1407 = vxor.u32 %v1391, 2147483648
    %v1408 = vxor.u32 %v1392, 2147483648
    %v1409 = vxor.u32 %v1393, 2147483648
    %v1410 = vxor.u32 %v1394, 2147483648
    %v1411 = vxor.u32 %v1395, 2147483648
    %v1412 = vxor.u32 %v1396, 2147483648
    %v1413 = vmul.f32 %v1397, 1.442695
    %v1414 = vpow.pop %v1413
    %v1415 = vmul.f32 %v1398, 1.442695
    %v1416 = vpow.pop %v1415
    %v1417 = vmul.f32 %v1399, 1.442695
    %v1418 = vpow.pop %v1417
    %v1419 = vmul.f32 %v1400, 1.442695
    %v1420 = vpow.pop %v1419
    %v1421 = vmul.f32 %v1401, 1.442695
    %v1422 = vpow.pop %v1421
    %v1423 = vmul.f32 %v1402, 1.442695
    %v1424 = vpow.pop %v1423
    %v1425 = vmul.f32 %v1403, 1.442695
    %v1426 = vpow.pop %v1425
    %v1427 = vmul.f32 %v1404, 1.442695
    %v1428 = vpow.pop %v1427
    %v1429 = vmul.f32 %v1405, 1.442695
    %v1430 = vpow.pop %v1429
    %v1431 = vmul.f32 %v1406, 1.442695
    %v1432 = vpow.pop %v1431
    %v1433 = vmul.f32 %v1407, 1.442695
    %v1434 = vpow.pop %v1433
    %v1435 = vmul.f32 %v1408, 1.442695
    %v1436 = vpow.pop %v1435
    %v1437 = vmul.f32 %v1409, 1.442695
    %v1438 = vpow.pop %v1437
    %v1439 = vmul.f32 %v1410, 1.442695
    %v1440 = vpow.pop %v1439
    %v1441 = vmul.f32 %v1411, 1.442695
    %v1442 = vpow.pop %v1441
    %v1443 = vmul.f32 %v1412, 1.442695
    %v1444 = vpow.pop %v1443
    %v1445 = vadd.f32 %v1414, 1.0
    %v1446 = vadd.f32 %v1416, 1.0
    %v1447 = vadd.f32 %v1418, 1.0
    %v1448 = vadd.f32 %v1420, 1.0
    %v1449 = vadd.f32 %v1422, 1.0
    %v1450 = vadd.f32 %v1424, 1.0
    %v1451 = vadd.f32 %v1426, 1.0
    %v1452 = vadd.f32 %v1428, 1.0
    %v1453 = vadd.f32 %v1430, 1.0
    %v1454 = vadd.f32 %v1432, 1.0
    %v1455 = vadd.f32 %v1434, 1.0
    %v1456 = vadd.f32 %v1436, 1.0
    %v1457 = vadd.f32 %v1438, 1.0
    %v1458 = vadd.f32 %v1440, 1.0
    %v1459 = vadd.f32 %v1442, 1.0
    %v1460 = vadd.f32 %v1444, 1.0
    %v1461 = vrcp.pop %v1445
    %v1462 = vmul.f32 1.0, %v1461
    %v1463 = vrcp.pop %v1446
    %v1464 = vmul.f32 1.0, %v1463
    %v1465 = vrcp.pop %v1447
    %v1466 = vmul.f32 1.0, %v1465
    %v1467 = vrcp.pop %v1448
    %v1468 = vmul.f32 1.0, %v1467
    %v1469 = vrcp.pop %v1449
    %v1470 = vmul.f32 1.0, %v1469
    %v1471 = vrcp.pop %v1450
    %v1472 = vmul.f32 1.0, %v1471
    %v1473 = vrcp.pop %v1451
    %v1474 = vmul.f32 1.0, %v1473
    %v1475 = vrcp.pop %v1452
    %v1476 = vmul.f32 1.0, %v1475
    %v1477 = vrcp.pop %v1453
    %v1478 = vmul.f32 1.0, %v1477
    %v1479 = vrcp.pop %v1454
    %v1480 = vmul.f32 1.0, %v1479
    %v1481 = vrcp.pop %v1455
    %v1482 = vmul.f32 1.0, %v1481
    %v1483 = vrcp.pop %v1456
    %v1484 = vmul.f32 1.0, %v1483
    %v1485 = vrcp.pop %v1457
    %v1486 = vmul.f32 1.0, %v1485
    %v1487 = vrcp.pop %v1458
    %v1488 = vmul.f32 1.0, %v1487
    %v1489 = vrcp.pop %v1459
    %v1490 = vmul.f32 1.0, %v1489
    %v1491 = vrcp.pop %v1460
    %v1492 = vmul.f32 1.0, %v1491
    %1509 = vrot.lane.b32.xlu0 %v1381, 32
    %v1510 = vpop.permute.xlu0 %1509
    %1511 = vrot.lane.b32.xlu0 %v1382, 32
    %v1512 = vpop.permute.xlu0 %1511
    %1513 = vrot.lane.b32.xlu0 %v1383, 32
    %v1514 = vpop.permute.xlu0 %1513
    %1515 = vrot.lane.b32.xlu0 %v1384, 32
    %v1516 = vpop.permute.xlu0 %1515
    %1517 = vrot.lane.b32.xlu0 %v1385, 32
    %v1518 = vpop.permute.xlu0 %1517
    %1519 = vrot.lane.b32.xlu0 %v1386, 32
    %v1520 = vpop.permute.xlu0 %1519
    %1521 = vrot.lane.b32.xlu0 %v1387, 32
    %v1522 = vpop.permute.xlu0 %1521
    %1523 = vrot.lane.b32.xlu0 %v1388, 32
    %v1524 = vpop.permute.xlu0 %1523
    %1525 = vrot.lane.b32.xlu0 %v1389, 32
    %v1526 = vpop.permute.xlu0 %1525
    %1527 = vrot.lane.b32.xlu0 %v1390, 32
    %v1528 = vpop.permute.xlu0 %1527
    %1529 = vrot.lane.b32.xlu0 %v1391, 32
    %v1530 = vpop.permute.xlu0 %1529
    %1531 = vrot.lane.b32.xlu0 %v1392, 32
    %v1532 = vpop.permute.xlu0 %1531
    %1533 = vrot.lane.b32.xlu0 %v1393, 32
    %v1534 = vpop.permute.xlu0 %1533
    %1535 = vrot.lane.b32.xlu0 %v1394, 32
    %v1536 = vpop.permute.xlu0 %1535
    %1537 = vrot.lane.b32.xlu0 %v1395, 32
    %v1538 = vpop.permute.xlu0 %1537
    %1539 = vrot.lane.b32.xlu0 %v1396, 32
    %v1540 = vpop.permute.xlu0 %1539
    %v1557 = vmul.f32 %v1462, %v1510
    %v1558 = vmul.f32 %v1464, %v1512
    %v1559 = vmul.f32 %v1466, %v1514
    %v1560 = vmul.f32 %v1468, %v1516
    %v1561 = vmul.f32 %v1470, %v1518
    %v1562 = vmul.f32 %v1472, %v1520
    %v1563 = vmul.f32 %v1474, %v1522
    %v1564 = vmul.f32 %v1476, %v1524
    %v1565 = vmul.f32 %v1478, %v1526
    %v1566 = vmul.f32 %v1480, %v1528
    %v1567 = vmul.f32 %v1482, %v1530
    %v1568 = vmul.f32 %v1484, %v1532
    %v1569 = vmul.f32 %v1486, %v1534
    %v1570 = vmul.f32 %v1488, %v1536
    %v1571 = vmul.f32 %v1490, %v1538
    %v1572 = vmul.f32 %v1492, %v1540
    %1589 = vrot.lane.b32.xlu0 %v1557, 64
    %v1590 = vpop.permute.xlu0 %1589
    %1591 = vrot.lane.b32.xlu0 %v1558, 64
    %v1592 = vpop.permute.xlu0 %1591
    %1593 = vrot.lane.b32.xlu0 %v1559, 64
    %v1594 = vpop.permute.xlu0 %1593
    %1595 = vrot.lane.b32.xlu0 %v1560, 64
    %v1596 = vpop.permute.xlu0 %1595
    %1597 = vrot.lane.b32.xlu0 %v1561, 64
    %v1598 = vpop.permute.xlu0 %1597
    %1599 = vrot.lane.b32.xlu0 %v1562, 64
    %v1600 = vpop.permute.xlu0 %1599
    %1601 = vrot.lane.b32.xlu0 %v1563, 64
    %v1602 = vpop.permute.xlu0 %1601
    %1603 = vrot.lane.b32.xlu0 %v1564, 64
    %v1604 = vpop.permute.xlu0 %1603
    %1605 = vrot.lane.b32.xlu0 %v1565, 64
    %v1606 = vpop.permute.xlu0 %1605
    %1607 = vrot.lane.b32.xlu0 %v1566, 64
    %v1608 = vpop.permute.xlu0 %1607
    %1609 = vrot.lane.b32.xlu0 %v1567, 64
    %v1610 = vpop.permute.xlu0 %1609
    %1611 = vrot.lane.b32.xlu0 %v1568, 64
    %v1612 = vpop.permute.xlu0 %1611
    %1613 = vrot.lane.b32.xlu0 %v1569, 64
    %v1614 = vpop.permute.xlu0 %1613
    %1615 = vrot.lane.b32.xlu0 %v1570, 64
    %v1616 = vpop.permute.xlu0 %1615
    %1617 = vrot.lane.b32.xlu0 %v1571, 64
    %v1618 = vpop.permute.xlu0 %1617
    %1619 = vrot.lane.b32.xlu0 %v1572, 64
    %v1620 = vpop.permute.xlu0 %1619
    %v1637 = vadd.f32 %v1381, %v1590
    %v1638 = vadd.f32 %v1382, %v1592
    %v1639 = vadd.f32 %v1383, %v1594
    %v1640 = vadd.f32 %v1384, %v1596
    %v1641 = vadd.f32 %v1385, %v1598
    %v1642 = vadd.f32 %v1386, %v1600
    %v1643 = vadd.f32 %v1387, %v1602
    %v1644 = vadd.f32 %v1388, %v1604
    %v1645 = vadd.f32 %v1389, %v1606
    %v1646 = vadd.f32 %v1390, %v1608
    %v1647 = vadd.f32 %v1391, %v1610
    %v1648 = vadd.f32 %v1392, %v1612
    %v1649 = vadd.f32 %v1393, %v1614
    %v1650 = vadd.f32 %v1394, %v1616
    %v1651 = vadd.f32 %v1395, %v1618
    %v1652 = vadd.f32 %v1396, %v1620
    %v1653 = vtanh.pop %v1637
    %v1654 = vtanh.pop %v1638
    %v1655 = vtanh.pop %v1639
    %v1656 = vtanh.pop %v1640
    %v1657 = vtanh.pop %v1641
    %v1658 = vtanh.pop %v1642
    %v1659 = vtanh.pop %v1643
    %v1660 = vtanh.pop %v1644
    %v1661 = vtanh.pop %v1645
    %v1662 = vtanh.pop %v1646
    %v1663 = vtanh.pop %v1647
    %v1664 = vtanh.pop %v1648
    %v1665 = vtanh.pop %v1649
    %v1666 = vtanh.pop %v1650
    %v1667 = vtanh.pop %v1651
    %v1668 = vtanh.pop %v1652
    %v1669 = vsub.f32 1.0, %v1462
    %v1670 = vsub.f32 1.0, %v1464
    %v1671 = vsub.f32 1.0, %v1466
    %v1672 = vsub.f32 1.0, %v1468
    %v1673 = vsub.f32 1.0, %v1470
    %v1674 = vsub.f32 1.0, %v1472
    %v1675 = vsub.f32 1.0, %v1474
    %v1676 = vsub.f32 1.0, %v1476
    %v1677 = vsub.f32 1.0, %v1478
    %v1678 = vsub.f32 1.0, %v1480
    %v1679 = vsub.f32 1.0, %v1482
    %v1680 = vsub.f32 1.0, %v1484
    %v1681 = vsub.f32 1.0, %v1486
    %v1682 = vsub.f32 1.0, %v1488
    %v1683 = vsub.f32 1.0, %v1490
    %v1684 = vsub.f32 1.0, %v1492
    %1701 = vrot.lane.b32.xlu0 %v1653, 96
    %v1702 = vpop.permute.xlu0 %1701
    %1703 = vrot.lane.b32.xlu0 %v1654, 96
    %v1704 = vpop.permute.xlu0 %1703
    %1705 = vrot.lane.b32.xlu0 %v1655, 96
    %v1706 = vpop.permute.xlu0 %1705
    %1707 = vrot.lane.b32.xlu0 %v1656, 96
    %v1708 = vpop.permute.xlu0 %1707
    %1709 = vrot.lane.b32.xlu0 %v1657, 96
    %v1710 = vpop.permute.xlu0 %1709
    %1711 = vrot.lane.b32.xlu0 %v1658, 96
    %v1712 = vpop.permute.xlu0 %1711
    %1713 = vrot.lane.b32.xlu0 %v1659, 96
    %v1714 = vpop.permute.xlu0 %1713
    %1715 = vrot.lane.b32.xlu0 %v1660, 96
    %v1716 = vpop.permute.xlu0 %1715
    %1717 = vrot.lane.b32.xlu0 %v1661, 96
    %v1718 = vpop.permute.xlu0 %1717
    %1719 = vrot.lane.b32.xlu0 %v1662, 96
    %v1720 = vpop.permute.xlu0 %1719
    %1721 = vrot.lane.b32.xlu0 %v1663, 96
    %v1722 = vpop.permute.xlu0 %1721
    %1723 = vrot.lane.b32.xlu0 %v1664, 96
    %v1724 = vpop.permute.xlu0 %1723
    %1725 = vrot.lane.b32.xlu0 %v1665, 96
    %v1726 = vpop.permute.xlu0 %1725
    %1727 = vrot.lane.b32.xlu0 %v1666, 96
    %v1728 = vpop.permute.xlu0 %1727
    %1729 = vrot.lane.b32.xlu0 %v1667, 96
    %v1730 = vpop.permute.xlu0 %1729
    %1731 = vrot.lane.b32.xlu0 %v1668, 96
    %v1732 = vpop.permute.xlu0 %1731
    %v1749 = vmul.f32 %v1669, %v1702
    %v1750 = vmul.f32 %v1670, %v1704
    %v1751 = vmul.f32 %v1671, %v1706
    %v1752 = vmul.f32 %v1672, %v1708
    %v1753 = vmul.f32 %v1673, %v1710
    %v1754 = vmul.f32 %v1674, %v1712
    %v1755 = vmul.f32 %v1675, %v1714
    %v1756 = vmul.f32 %v1676, %v1716
    %v1757 = vmul.f32 %v1677, %v1718
    %v1758 = vmul.f32 %v1678, %v1720
    %v1759 = vmul.f32 %v1679, %v1722
    %v1760 = vmul.f32 %v1680, %v1724
    %v1761 = vmul.f32 %v1681, %v1726
    %v1762 = vmul.f32 %v1682, %v1728
    %v1763 = vmul.f32 %v1683, %v1730
    %v1764 = vmul.f32 %v1684, %v1732
    %v1765 = vmul.f32 %v1462, %v961
    %v1766 = vmul.f32 %v1464, %v962
    %v1767 = vmul.f32 %v1466, %v963
    %v1768 = vmul.f32 %v1468, %v964
    %v1769 = vmul.f32 %v1470, %v965
    %v1770 = vmul.f32 %v1472, %v966
    %v1771 = vmul.f32 %v1474, %v967
    %v1772 = vmul.f32 %v1476, %v968
    %v1773 = vmul.f32 %v1478, %v969
    %v1774 = vmul.f32 %v1480, %v970
    %v1775 = vmul.f32 %v1482, %v971
    %v1776 = vmul.f32 %v1484, %v972
    %v1777 = vmul.f32 %v1486, %v973
    %v1778 = vmul.f32 %v1488, %v974
    %v1779 = vmul.f32 %v1490, %v975
    %v1780 = vmul.f32 %v1492, %v976
    %v1781 = vadd.f32 %v1749, %v1765
    %v1782 = vadd.f32 %v1750, %v1766
    %v1783 = vadd.f32 %v1751, %v1767
    %v1784 = vadd.f32 %v1752, %v1768
    %v1785 = vadd.f32 %v1753, %v1769
    %v1786 = vadd.f32 %v1754, %v1770
    %v1787 = vadd.f32 %v1755, %v1771
    %v1788 = vadd.f32 %v1756, %v1772
    %v1789 = vadd.f32 %v1757, %v1773
    %v1790 = vadd.f32 %v1758, %v1774
    %v1791 = vadd.f32 %v1759, %v1775
    %v1792 = vadd.f32 %v1760, %v1776
    %v1793 = vadd.f32 %v1761, %v1777
    %v1794 = vadd.f32 %v1762, %v1778
    %v1795 = vadd.f32 %v1763, %v1779
    %v1796 = vadd.f32 %v1764, %v1780
    %1813 = vrot.lane.b32.xlu0 %v1781, 96
    %v1814 = vpop.permute.xlu0 %1813
    %1815 = vrot.lane.b32.xlu0 %v1782, 96
    %v1816 = vpop.permute.xlu0 %1815
    %1817 = vrot.lane.b32.xlu0 %v1783, 96
    %v1818 = vpop.permute.xlu0 %1817
    %1819 = vrot.lane.b32.xlu0 %v1784, 96
    %v1820 = vpop.permute.xlu0 %1819
    %1821 = vrot.lane.b32.xlu0 %v1785, 96
    %v1822 = vpop.permute.xlu0 %1821
    %1823 = vrot.lane.b32.xlu0 %v1786, 96
    %v1824 = vpop.permute.xlu0 %1823
    %1825 = vrot.lane.b32.xlu0 %v1787, 96
    %v1826 = vpop.permute.xlu0 %1825
    %1827 = vrot.lane.b32.xlu0 %v1788, 96
    %v1828 = vpop.permute.xlu0 %1827
    %1829 = vrot.lane.b32.xlu0 %v1789, 96
    %v1830 = vpop.permute.xlu0 %1829
    %1831 = vrot.lane.b32.xlu0 %v1790, 96
    %v1832 = vpop.permute.xlu0 %1831
    %1833 = vrot.lane.b32.xlu0 %v1791, 96
    %v1834 = vpop.permute.xlu0 %1833
    %1835 = vrot.lane.b32.xlu0 %v1792, 96
    %v1836 = vpop.permute.xlu0 %1835
    %1837 = vrot.lane.b32.xlu0 %v1793, 96
    %v1838 = vpop.permute.xlu0 %1837
    %1839 = vrot.lane.b32.xlu0 %v1794, 96
    %v1840 = vpop.permute.xlu0 %1839
    %1841 = vrot.lane.b32.xlu0 %v1795, 96
    %v1842 = vpop.permute.xlu0 %1841
    %1843 = vrot.lane.b32.xlu0 %v1796, 96
    %v1844 = vpop.permute.xlu0 %1843
    %1861 = vst.msk [vmem:[#allocation2] sm:$0xff] %vm236, %v1814
    %1862 = vst.msk [vmem:[#allocation2 + $0x8] sm:$0xff] %vm236, %v1816
    %1863 = vst.msk [vmem:[#allocation2 + $0x10] sm:$0xff] %vm236, %v1818
    %1864 = vst.msk [vmem:[#allocation2 + $0x18] sm:$0xff] %vm236, %v1820
    %1865 = vst.msk [vmem:[#allocation2 + $0x20] sm:$0xff] %vm236, %v1822
    %1866 = vst.msk [vmem:[#allocation2 + $0x28] sm:$0xff] %vm236, %v1824
    %1867 = vst.msk [vmem:[#allocation2 + $0x30] sm:$0xff] %vm236, %v1826
    %1868 = vst.msk [vmem:[#allocation2 + $0x38] sm:$0xff] %vm236, %v1828
    %1869 = vst.msk [vmem:[#allocation2 + $0x40] sm:$0xff] %vm236, %v1830
    %1870 = vst.msk [vmem:[#allocation2 + $0x48] sm:$0xff] %vm236, %v1832
    %1871 = vst.msk [vmem:[#allocation2 + $0x50] sm:$0xff] %vm236, %v1834
    %1872 = vst.msk [vmem:[#allocation2 + $0x58] sm:$0xff] %vm236, %v1836
    %1873 = vst.msk [vmem:[#allocation2 + $0x60] sm:$0xff] %vm236, %v1838
    %1874 = vst.msk [vmem:[#allocation2 + $0x68] sm:$0xff] %vm236, %v1840
    %1875 = vst.msk [vmem:[#allocation2 + $0x70] sm:$0xff] %vm236, %v1842
    %1876 = vst.msk [vmem:[#allocation2 + $0x78] sm:$0xff] %vm236, %v1844
    // Predicated region
    $region22: #{dense_ggnn_forward.1} parent=1 // pred_check
      _
    $region23: #{dense_ggnn_forward.1} parent=1 // pred_check_branch
      %1878 = sbr.rel (0) target = $region25
    $region24: #{dense_ggnn_forward.1} parent=1 // pred_region
      %s1880 = ssub.s32 2048, 2048
      %1881 = vsyncadd [#allocation3], %s1880
      %s1882 = sshll.u32 [#allocation2], 4
      %s1883 = int_to_ptr.vmem [resolvable:$true] %s1882
      %1888 = dma.vmem_to_hbm [thread:$0]  %s1883, 2048, %s5, [#allocation3], 128, 128, 8
    $region25: #{dense_ggnn_forward.1} parent=1 // pred_fallthru
      _
    // Predicated region
    $region26: #{dense_ggnn_forward.1} parent=1 // pred_check
      _
    $region27: #{dense_ggnn_forward.1} parent=1 // pred_check_branch
      %1890 = sbr.rel (0) target = $region29
    $region28: #{dense_ggnn_forward.1} parent=1 // pred_region
      %1891 = dma.done [#allocation3], 2048
    $region29: #{dense_ggnn_forward.1} parent=1 // pred_fallthru
      _
    %1892 = vsyncpa [#allocation3], 1

</llo_original>
